<compile_context>
chip_gen: v7x
topology: tpu7x:2x2x1
jax: 0.10.0
libtpu: 0.0.40
codegen_flags: <defaults>
</compile_context>

<pallas_src>
import functools
import math

import jax
import jax.numpy as jnp
from jax.experimental import pallas as pl
from jax.experimental.pallas import tpu as pltpu


# ----------------------------------------------------------------------------
# Glue: projection of each row of W onto the L1 ball of radius kappa
# (equivalent to IGNN's projection_norm_inf).  Plain JAX, runs outside the
# kernel.  rho is guarded against 0 (rows already inside the ball).
# ----------------------------------------------------------------------------
def projection_norm_inf(W, kappa):
    abs_w = jnp.abs(W)
    row_sum = abs_w.sum(axis=-1, keepdims=True)
    u = jnp.flip(jnp.sort(abs_w, axis=-1), axis=-1)            # descending
    css = jnp.cumsum(u, axis=-1) - kappa
    idx = jnp.arange(1, W.shape[-1] + 1, dtype=W.dtype)
    rho = jnp.sum((u - css / idx) > 0, axis=-1, keepdims=True)
    rho_safe = jnp.maximum(rho, 1)                             # avoid /0, idx -1
    theta = (jnp.take_along_axis(css, rho_safe - 1, axis=-1)
             / rho_safe.astype(W.dtype))
    projected = jnp.sign(W) * jnp.maximum(abs_w - theta, 0.0)
    return jnp.where(row_sum > kappa, projected, W)


# ----------------------------------------------------------------------------
# Pallas kernel: encoder matmul + early-exit fixed-point iteration + residual.
# Everything is VMEM-resident (single invocation, no grid / no pipelining).
# ----------------------------------------------------------------------------
def _ignn_kernel(w_ref, h_ref, bwf_ref, f0t_ref, x0_ref, out_ref, *,
                 fw_mitr, tol, check_every, compute_dtype):
    W = w_ref[...]          # (p, p)  compute_dtype
    A = h_ref[...]          # (n, n)  compute_dtype
    # B_encoder with the bias folded in as an extra "ones" input row:
    #   B = Hv.T = [Bw | b] @ [F0^T ; 1]
    # One-time matmul kept in f32: B feeds both the ReLU input and the final
    # residual, so its error would not be damped by the contraction.
    B = jnp.dot(bwf_ref[...], f0t_ref[...],
                preferred_element_type=jnp.float32)            # (p, n) f32

    def fix_step(x_c):
        # torch: X_new = W @ X ; support = spmm(A^T, X_new^T)^T == (W X) @ A
        wx = jnp.dot(W, x_c, preferred_element_type=jnp.float32)       # (p, n)
        support = jnp.dot(wx.astype(compute_dtype), A,
                          preferred_element_type=jnp.float32)          # (p, n)
        return jnp.maximum(support + B, 0.0)                           # ReLU

    def cond(carry):
        return jnp.logical_and(carry[0] < fw_mitr, carry[-1] >= tol)

    x0 = x0_ref[...]                                            # (p, n) f32
    mixed = jnp.dtype(compute_dtype) != jnp.dtype(jnp.float32)

    if mixed:
        # Carry both the f32 state and its compute-dtype copy so only one
        # cast per iteration remains (produced in the ReLU epilogue).
        def body(carry):
            it, x, x_c, _ = carry
            x_prev = x
            for _ in range(check_every):          # static unroll
                x_prev = x
                x = fix_step(x_c)
                x_c = x.astype(compute_dtype)
            err = jnp.max(jnp.abs(x - x_prev))    # f32 cross-lane reduce
            return it + check_every, x, x_c, err

        init = (jnp.asarray(0, jnp.int32), x0, x0.astype(compute_dtype),
                jnp.asarray(jnp.inf, jnp.float32))
        x_fix = jax.lax.while_loop(cond, body, init)[1]
    else:
        def body(carry):
            it, x, _ = carry
            x_prev = x
            for _ in range(check_every):          # static unroll
                x_prev = x
                x = fix_step(x)
            err = jnp.max(jnp.abs(x - x_prev))
            return it + check_every, x, err

        init = (jnp.asarray(0, jnp.int32), x0,
                jnp.asarray(jnp.inf, jnp.float32))
        x_fix = jax.lax.while_loop(cond, body, init)[1]

    # Hv = Hv.T + fixpoint_solution
    out_ref[...] = B + x_fix


def _round_up(x, m):
    return ((x + m - 1) // m) * m


def ignn_layer_forward(W, H, F0, Bw, Bb, X0, *, kappa=0.99, fw_mitr=50,
                       tol=3e-6, compute_dtype=None):
    """Reproduces IGNN_Layer.forward (forward solve only).

    kappa only toggles the W projection on/off (None -> off); the projection
    radius is 0.9, matching the hard-coded `kappa=0.9 / 1` in the reference.
    compute_dtype=None auto-selects f32 for small p (MXU-underfilled regime)
    and bf16 otherwise; accumulation/state is always f32.
    """
    p, d_in = Bw.shape
    n = F0.shape[0]

    proj_radius = 0.9 / 1
    if kappa is not None:
        W = projection_norm_inf(W.astype(jnp.float32), proj_radius)

    # --- Lane/sublane-friendly padding.  n (lane dim of the hot loop) to a
    # multiple of 128 so every store is an unmasked vst; p and the encoder
    # contraction dim only to sublane granularity. ---
    p_pad = _round_up(p, 16)
    n_pad = _round_up(n, 128)
    d_pad = _round_up(d_in + 1, 8)

    if compute_dtype is None:
        # With p_pad < 128 the hot matmuls cannot be MXU-bound anyway; the
        # bf16 casts would just add VPU passes on the critical path.
        compute_dtype = jnp.float32 if p_pad < 128 else jnp.bfloat16
    mixed = jnp.dtype(compute_dtype) != jnp.dtype(jnp.float32)

    W_p = jnp.zeros((p_pad, p_pad), jnp.float32).at[:p, :p].set(W)
    H_p = jnp.zeros((n_pad, n_pad), jnp.float32).at[:n, :n].set(
        H.astype(jnp.float32))

    # Fold the encoder bias into the matmul: BwF = [Bw | Bb], F0T = [F0^T ; 1].
    bwf = jnp.concatenate(
        [Bw.astype(jnp.float32), Bb.reshape(p, 1).astype(jnp.float32)], axis=1)
    f0t = jnp.concatenate(
        [jnp.transpose(F0).astype(jnp.float32), jnp.ones((1, n), jnp.float32)],
        axis=0)
    BwF_p = jnp.zeros((p_pad, d_pad), jnp.float32).at[:p, :d_in + 1].set(bwf)
    F0T_p = jnp.zeros((d_pad, n_pad), jnp.float32).at[:d_in + 1, :n].set(f0t)
    X0_p = jnp.zeros((p_pad, n_pad), jnp.float32).at[:p, :n].set(
        X0.astype(jnp.float32))

    # Hot-loop MXU operands in compute_dtype; state/accum stay f32.
    W_c = W_p.astype(compute_dtype)
    H_c = H_p.astype(compute_dtype)
    if kappa is not None and mixed:
        # bf16 rounding could push a projected row's L1 norm slightly above
        # the radius; renormalize offending rows (in f32) post-cast so the
        # contraction guarantee of the fixed-point iteration is preserved.
        row = jnp.abs(W_c.astype(jnp.float32)).sum(axis=-1, keepdims=True)
        scale = jnp.minimum(1.0, proj_radius / jnp.maximum(row, 1e-12))
        W_c = (W_c.astype(jnp.float32) * scale).astype(compute_dtype)

    # Convergence-check cadence: largest small divisor of fw_mitr so we never
    # exceed fw_mitr total iterations while keeping the serializing
    # max-reduce off most steps.
    check_every = 1
    for c in (10, 8, 5, 4, 2):
        if c <= fw_mitr and fw_mitr % c == 0:
            check_every = c
            break

    # Explicit VMEM budget (no double buffering any more): operands + output
    # + live in-loop f32 temporaries (B, x, x_prev, wx/support) + the
    # compute-dtype state copy, plus headroom for Mosaic internals.
    cb = jnp.dtype(compute_dtype).itemsize
    operand_bytes = sum(int(a.size) * a.dtype.itemsize
                        for a in (W_c, H_c, BwF_p, F0T_p, X0_p))
    out_bytes = p_pad * n_pad * 4
    scratch_bytes = (5 * 4 + cb) * p_pad * n_pad
    vmem_bytes = operand_bytes + out_bytes + scratch_bytes + (4 << 20)
    try:
        vmem_cap = int(pltpu.get_tpu_info().vmem_capacity_bytes)
    except Exception:
        vmem_cap = 64 << 20                     # conservative fallback (v7x)
    vmem_bytes = int(min(max(vmem_bytes, 16 << 20), vmem_cap - (8 << 20)))

    kernel = functools.partial(
        _ignn_kernel, fw_mitr=fw_mitr, tol=tol, check_every=check_every,
        compute_dtype=compute_dtype)

    vmem_spec = pl.BlockSpec(memory_space=pltpu.MemorySpace.VMEM)
    out_padded = pl.pallas_call(
        kernel,
        in_specs=[vmem_spec, vmem_spec, vmem_spec, vmem_spec, vmem_spec],
        out_specs=vmem_spec,
        out_shape=jax.ShapeDtypeStruct((p_pad, n_pad), jnp.float32),
        compiler_params=pltpu.CompilerParams(vmem_limit_bytes=vmem_bytes),
    )(W_c, H_c, BwF_p, F0T_p, X0_p)

    return out_padded[:p, :n]


# ----------------------------------------------------------------------------
# Pure-JAX reference (mirrors the PyTorch code path, f32 throughout).
# ----------------------------------------------------------------------------
def reference_forward(W, H, F0, Bw, Bb, X0, *, fw_mitr=50, tol=3e-6):
    Wp = projection_norm_inf(W, 0.9)
    Hv = F0 @ Bw.T + Bb            # (n, p)
    B = Hv.T                       # (p, n)
    X = X0
    X_new = X0
    for _ in range(fw_mitr):
        X_new = jnp.maximum(Wp @ X @ H + B, 0.0)
        err = float(jnp.max(jnp.abs(X_new - X)))
        if err < tol:
            break
        X = X_new
    return B + X_new


if __name__ == "__main__":
    key = jax.random.PRNGKey(0)
    in_features_node = 16
    # The reference forward requires nhid_node == nhid_edge for shape
    # consistency (W is (q, q) and multiplies a (p, n) state).
    nhid_node = nhid_edge = 32
    num_node = 64
    fw_mitr = 50

    k_w, k_bw, k_bb, k_f0, k_h = jax.random.split(key, 5)

    # W ~ U(-stdv, stdv), stdv = 1/sqrt(p*q)   (IGNN_Layer.init)
    stdv = 1.0 / math.sqrt(nhid_node * nhid_edge)
    W = jax.random.uniform(k_w, (nhid_edge, nhid_edge), jnp.float32,
                           -stdv, stdv)

    # nn.Linear(in_features_node, p) default-style init.
    bound = 1.0 / math.sqrt(in_features_node)
    Bw = jax.random.uniform(k_bw, (nhid_node, in_features_node), jnp.float32,
                            -bound, bound)
    Bb = jax.random.uniform(k_bb, (nhid_node,), jnp.float32, -bound, bound)

    # Node features F0: (num_node, in_features_node)
    F0 = jax.random.normal(k_f0, (num_node, in_features_node), jnp.float32)

    # Dense row-normalized adjacency (with self loops) standing in for the
    # sparse propagation matrix H.
    adj = (jax.random.uniform(k_h, (num_node, num_node)) < 0.1).astype(
        jnp.float32)
    adj = jnp.minimum(adj + adj.T + jnp.eye(num_node, dtype=jnp.float32), 1.0)
    H = adj / adj.sum(axis=1, keepdims=True)

    # Initial fixed-point state X_0: (p, n)
    X0 = jnp.zeros((nhid_node, num_node), jnp.float32)

    ref = reference_forward(W, H, F0, Bw, Bb, X0, fw_mitr=fw_mitr)
    ref_scale = float(jnp.max(jnp.abs(ref)))

    # Default path: compute_dtype auto-selects f32 here (p_pad < 128), so a
    # tight numerical check of the kernel semantics is possible.
    out_auto = ignn_layer_forward(W, H, F0, Bw, Bb, X0, kappa=0.99,
                                  fw_mitr=fw_mitr)
    out_auto = jax.block_until_ready(out_auto)
    assert out_auto.shape == (nhid_node, num_node)
    err_auto = float(jnp.max(jnp.abs(out_auto - ref)))
    assert err_auto < 5e-4, f"auto/f32 kernel mismatch vs reference: {err_auto}"

    # Explicit bf16-MXU path (f32 accumulation/state), looser tolerance.
    out_bf16 = ignn_layer_forward(W, H, F0, Bw, Bb, X0, kappa=0.99,
                                  fw_mitr=fw_mitr,
                                  compute_dtype=jnp.bfloat16)
    out_bf16 = jax.block_until_ready(out_bf16)
    err_bf16 = float(jnp.max(jnp.abs(out_bf16 - ref)))
    assert err_bf16 < 5e-2 * max(1.0, ref_scale), \
        f"bf16 kernel mismatch vs reference: {err_bf16}"

    print("KERNEL_OK")
</pallas_src>

<mosaic_0001>
module attributes {stable_mosaic.version = 11 : i64} {
  func.func @_ignn_kernel(%arg0: memref<32x32xf32, #tpu.memory_space<vmem>>, %arg1: memref<128x128xf32, #tpu.memory_space<vmem>>, %arg2: memref<32x24xf32, #tpu.memory_space<vmem>>, %arg3: memref<24x128xf32, #tpu.memory_space<vmem>>, %arg4: memref<32x128xf32, #tpu.memory_space<vmem>>, %arg5: memref<32x128xf32, #tpu.memory_space<vmem>>) attributes {dimension_semantics = [], scalar_prefetch = 0 : i64, scratch_operands = 0 : i64, tpu.core_type = #tpu.core_type<tc>} {
    %c0 = arith.constant 0 : index
    %c0_0 = arith.constant 0 : index
    %0 = vector.load %arg0[%c0, %c0_0] : memref<32x32xf32, #tpu.memory_space<vmem>>, vector<32x32xf32>
    %c0_1 = arith.constant 0 : index
    %c0_2 = arith.constant 0 : index
    %1 = vector.load %arg1[%c0_1, %c0_2] : memref<128x128xf32, #tpu.memory_space<vmem>>, vector<128x128xf32>
    %c0_3 = arith.constant 0 : index
    %c0_4 = arith.constant 0 : index
    %2 = vector.load %arg2[%c0_3, %c0_4] : memref<32x24xf32, #tpu.memory_space<vmem>>, vector<32x24xf32>
    %c0_5 = arith.constant 0 : index
    %c0_6 = arith.constant 0 : index
    %3 = vector.load %arg3[%c0_5, %c0_6] : memref<24x128xf32, #tpu.memory_space<vmem>>, vector<24x128xf32>
    %cst = arith.constant dense<0.000000e+00> : vector<32x128xf32>
    %4 = tpu.matmul %2, %3, %cst {dimension_numbers = #tpu.dot_dimension_numbers<[1], [0], [0], [1], [0, 0, 1, 1], [], []>} : vector<32x24xf32>, vector<24x128xf32>, vector<32x128xf32> -> vector<32x128xf32>
    %c0_7 = arith.constant 0 : index
    %c0_8 = arith.constant 0 : index
    %5 = vector.load %arg4[%c0_7, %c0_8] : memref<32x128xf32, #tpu.memory_space<vmem>>, vector<32x128xf32>
    %c0_i32 = arith.constant 0 : i32
    %cst_9 = arith.constant 0x7F800000 : f32
    %6:3 = scf.while (%arg6 = %c0_i32, %arg7 = %5, %arg8 = %cst_9) : (i32, vector<32x128xf32>, f32) -> (i32, vector<32x128xf32>, f32) {
      %c50_i32 = arith.constant 50 : i32
      %9 = arith.cmpi slt, %arg6, %c50_i32 : i32
      %cst_12 = arith.constant 3.000000e-06 : f32
      %10 = arith.cmpf oge, %arg8, %cst_12 : f32
      %11 = arith.andi %9, %10 : i1
      scf.condition(%11) %arg6, %arg7, %arg8 : i32, vector<32x128xf32>, f32
    } do {
    ^bb0(%arg6: i32, %arg7: vector<32x128xf32>, %arg8: f32):
      %cst_12 = arith.constant dense<0.000000e+00> : vector<32x128xf32>
      %9 = tpu.matmul %0, %arg7, %cst_12 {dimension_numbers = #tpu.dot_dimension_numbers<[1], [0], [0], [1], [0, 0, 1, 1], [], []>} : vector<32x32xf32>, vector<32x128xf32>, vector<32x128xf32> -> vector<32x128xf32>
      %cst_13 = arith.constant dense<0.000000e+00> : vector<32x128xf32>
      %10 = tpu.matmul %9, %1, %cst_13 {dimension_numbers = #tpu.dot_dimension_numbers<[1], [0], [0], [1], [0, 0, 1, 1], [], []>} : vector<32x128xf32>, vector<128x128xf32>, vector<32x128xf32> -> vector<32x128xf32>
      %11 = arith.addf %10, %4 : vector<32x128xf32>
      %cst_14 = arith.constant 0.000000e+00 : f32
      %12 = vector.broadcast %cst_14 : f32 to vector<32x128xf32>
      %13 = arith.maximumf %11, %12 : vector<32x128xf32>
      %cst_15 = arith.constant dense<0.000000e+00> : vector<32x128xf32>
      %14 = tpu.matmul %0, %13, %cst_15 {dimension_numbers = #tpu.dot_dimension_numbers<[1], [0], [0], [1], [0, 0, 1, 1], [], []>} : vector<32x32xf32>, vector<32x128xf32>, vector<32x128xf32> -> vector<32x128xf32>
      %cst_16 = arith.constant dense<0.000000e+00> : vector<32x128xf32>
      %15 = tpu.matmul %14, %1, %cst_16 {dimension_numbers = #tpu.dot_dimension_numbers<[1], [0], [0], [1], [0, 0, 1, 1], [], []>} : vector<32x128xf32>, vector<128x128xf32>, vector<32x128xf32> -> vector<32x128xf32>
      %16 = arith.addf %15, %4 : vector<32x128xf32>
      %cst_17 = arith.constant 0.000000e+00 : f32
      %17 = vector.broadcast %cst_17 : f32 to vector<32x128xf32>
      %18 = arith.maximumf %16, %17 : vector<32x128xf32>
      %cst_18 = arith.constant dense<0.000000e+00> : vector<32x128xf32>
      %19 = tpu.matmul %0, %18, %cst_18 {dimension_numbers = #tpu.dot_dimension_numbers<[1], [0], [0], [1], [0, 0, 1, 1], [], []>} : vector<32x32xf32>, vector<32x128xf32>, vector<32x128xf32> -> vector<32x128xf32>
      %cst_19 = arith.constant dense<0.000000e+00> : vector<32x128xf32>
      %20 = tpu.matmul %19, %1, %cst_19 {dimension_numbers = #tpu.dot_dimension_numbers<[1], [0], [0], [1], [0, 0, 1, 1], [], []>} : vector<32x128xf32>, vector<128x128xf32>, vector<32x128xf32> -> vector<32x128xf32>
      %21 = arith.addf %20, %4 : vector<32x128xf32>
      %cst_20 = arith.constant 0.000000e+00 : f32
      %22 = vector.broadcast %cst_20 : f32 to vector<32x128xf32>
      %23 = arith.maximumf %21, %22 : vector<32x128xf32>
      %cst_21 = arith.constant dense<0.000000e+00> : vector<32x128xf32>
      %24 = tpu.matmul %0, %23, %cst_21 {dimension_numbers = #tpu.dot_dimension_numbers<[1], [0], [0], [1], [0, 0, 1, 1], [], []>} : vector<32x32xf32>, vector<32x128xf32>, vector<32x128xf32> -> vector<32x128xf32>
      %cst_22 = arith.constant dense<0.000000e+00> : vector<32x128xf32>
      %25 = tpu.matmul %24, %1, %cst_22 {dimension_numbers = #tpu.dot_dimension_numbers<[1], [0], [0], [1], [0, 0, 1, 1], [], []>} : vector<32x128xf32>, vector<128x128xf32>, vector<32x128xf32> -> vector<32x128xf32>
      %26 = arith.addf %25, %4 : vector<32x128xf32>
      %cst_23 = arith.constant 0.000000e+00 : f32
      %27 = vector.broadcast %cst_23 : f32 to vector<32x128xf32>
      %28 = arith.maximumf %26, %27 : vector<32x128xf32>
      %cst_24 = arith.constant dense<0.000000e+00> : vector<32x128xf32>
      %29 = tpu.matmul %0, %28, %cst_24 {dimension_numbers = #tpu.dot_dimension_numbers<[1], [0], [0], [1], [0, 0, 1, 1], [], []>} : vector<32x32xf32>, vector<32x128xf32>, vector<32x128xf32> -> vector<32x128xf32>
      %cst_25 = arith.constant dense<0.000000e+00> : vector<32x128xf32>
      %30 = tpu.matmul %29, %1, %cst_25 {dimension_numbers = #tpu.dot_dimension_numbers<[1], [0], [0], [1], [0, 0, 1, 1], [], []>} : vector<32x128xf32>, vector<128x128xf32>, vector<32x128xf32> -> vector<32x128xf32>
      %31 = arith.addf %30, %4 : vector<32x128xf32>
      %cst_26 = arith.constant 0.000000e+00 : f32
      %32 = vector.broadcast %cst_26 : f32 to vector<32x128xf32>
      %33 = arith.maximumf %31, %32 : vector<32x128xf32>
      %cst_27 = arith.constant dense<0.000000e+00> : vector<32x128xf32>
      %34 = tpu.matmul %0, %33, %cst_27 {dimension_numbers = #tpu.dot_dimension_numbers<[1], [0], [0], [1], [0, 0, 1, 1], [], []>} : vector<32x32xf32>, vector<32x128xf32>, vector<32x128xf32> -> vector<32x128xf32>
      %cst_28 = arith.constant dense<0.000000e+00> : vector<32x128xf32>
      %35 = tpu.matmul %34, %1, %cst_28 {dimension_numbers = #tpu.dot_dimension_numbers<[1], [0], [0], [1], [0, 0, 1, 1], [], []>} : vector<32x128xf32>, vector<128x128xf32>, vector<32x128xf32> -> vector<32x128xf32>
      %36 = arith.addf %35, %4 : vector<32x128xf32>
      %cst_29 = arith.constant 0.000000e+00 : f32
      %37 = vector.broadcast %cst_29 : f32 to vector<32x128xf32>
      %38 = arith.maximumf %36, %37 : vector<32x128xf32>
      %cst_30 = arith.constant dense<0.000000e+00> : vector<32x128xf32>
      %39 = tpu.matmul %0, %38, %cst_30 {dimension_numbers = #tpu.dot_dimension_numbers<[1], [0], [0], [1], [0, 0, 1, 1], [], []>} : vector<32x32xf32>, vector<32x128xf32>, vector<32x128xf32> -> vector<32x128xf32>
      %cst_31 = arith.constant dense<0.000000e+00> : vector<32x128xf32>
      %40 = tpu.matmul %39, %1, %cst_31 {dimension_numbers = #tpu.dot_dimension_numbers<[1], [0], [0], [1], [0, 0, 1, 1], [], []>} : vector<32x128xf32>, vector<128x128xf32>, vector<32x128xf32> -> vector<32x128xf32>
      %41 = arith.addf %40, %4 : vector<32x128xf32>
      %cst_32 = arith.constant 0.000000e+00 : f32
      %42 = vector.broadcast %cst_32 : f32 to vector<32x128xf32>
      %43 = arith.maximumf %41, %42 : vector<32x128xf32>
      %cst_33 = arith.constant dense<0.000000e+00> : vector<32x128xf32>
      %44 = tpu.matmul %0, %43, %cst_33 {dimension_numbers = #tpu.dot_dimension_numbers<[1], [0], [0], [1], [0, 0, 1, 1], [], []>} : vector<32x32xf32>, vector<32x128xf32>, vector<32x128xf32> -> vector<32x128xf32>
      %cst_34 = arith.constant dense<0.000000e+00> : vector<32x128xf32>
      %45 = tpu.matmul %44, %1, %cst_34 {dimension_numbers = #tpu.dot_dimension_numbers<[1], [0], [0], [1], [0, 0, 1, 1], [], []>} : vector<32x128xf32>, vector<128x128xf32>, vector<32x128xf32> -> vector<32x128xf32>
      %46 = arith.addf %45, %4 : vector<32x128xf32>
      %cst_35 = arith.constant 0.000000e+00 : f32
      %47 = vector.broadcast %cst_35 : f32 to vector<32x128xf32>
      %48 = arith.maximumf %46, %47 : vector<32x128xf32>
      %cst_36 = arith.constant dense<0.000000e+00> : vector<32x128xf32>
      %49 = tpu.matmul %0, %48, %cst_36 {dimension_numbers = #tpu.dot_dimension_numbers<[1], [0], [0], [1], [0, 0, 1, 1], [], []>} : vector<32x32xf32>, vector<32x128xf32>, vector<32x128xf32> -> vector<32x128xf32>
      %cst_37 = arith.constant dense<0.000000e+00> : vector<32x128xf32>
      %50 = tpu.matmul %49, %1, %cst_37 {dimension_numbers = #tpu.dot_dimension_numbers<[1], [0], [0], [1], [0, 0, 1, 1], [], []>} : vector<32x128xf32>, vector<128x128xf32>, vector<32x128xf32> -> vector<32x128xf32>
      %51 = arith.addf %50, %4 : vector<32x128xf32>
      %cst_38 = arith.constant 0.000000e+00 : f32
      %52 = vector.broadcast %cst_38 : f32 to vector<32x128xf32>
      %53 = arith.maximumf %51, %52 : vector<32x128xf32>
      %cst_39 = arith.constant dense<0.000000e+00> : vector<32x128xf32>
      %54 = tpu.matmul %0, %53, %cst_39 {dimension_numbers = #tpu.dot_dimension_numbers<[1], [0], [0], [1], [0, 0, 1, 1], [], []>} : vector<32x32xf32>, vector<32x128xf32>, vector<32x128xf32> -> vector<32x128xf32>
      %cst_40 = arith.constant dense<0.000000e+00> : vector<32x128xf32>
      %55 = tpu.matmul %54, %1, %cst_40 {dimension_numbers = #tpu.dot_dimension_numbers<[1], [0], [0], [1], [0, 0, 1, 1], [], []>} : vector<32x128xf32>, vector<128x128xf32>, vector<32x128xf32> -> vector<32x128xf32>
      %56 = arith.addf %55, %4 : vector<32x128xf32>
      %cst_41 = arith.constant 0.000000e+00 : f32
      %57 = vector.broadcast %cst_41 : f32 to vector<32x128xf32>
      %58 = arith.maximumf %56, %57 : vector<32x128xf32>
      %59 = arith.subf %58, %53 : vector<32x128xf32>
      %60 = math.absf %59 : vector<32x128xf32>
      %61 = vector.shape_cast %60 : vector<32x128xf32> to vector<1x32x128xf32>
      %cst_42 = arith.constant dense<0xFF800000> : vector<1xf32>
      %62 = vector.multi_reduction <maximumf>, %61, %cst_42 [1, 2] : vector<1x32x128xf32> to vector<1xf32>
      %63 = vector.shape_cast %62 : vector<1xf32> to vector<1x1x1xf32>
      %64 = vector.extract %63[0, 0, 0] : f32 from vector<1x1x1xf32>
      %c10_i32 = arith.constant 10 : i32
      %65 = arith.addi %arg6, %c10_i32 : i32
      scf.yield %65, %58, %64 : i32, vector<32x128xf32>, f32
    }
    %7 = arith.addf %4, %6#1 : vector<32x128xf32>
    %c0_10 = arith.constant 0 : index
    %c0_11 = arith.constant 0 : index
    %8 = vector.load %arg5[%c0_10, %c0_11] : memref<32x128xf32, #tpu.memory_space<vmem>>, vector<32x128xf32>
    tpu.vector_store %arg5[%c0_10, %c0_11], %7 {strides = array<i32>} : memref<32x128xf32, #tpu.memory_space<vmem>>, vector<32x128xf32>,
    return
  }
}

</mosaic_0001>

<llo_original>
// kernel: tpu_custom_call.1
$region0: #{tpu_custom_call.1}
  #allocation0 [shape = 'u32[]', space=smem, size = 0x4, offset = 0x4, fixed_abs, tag = 'smem constant byte address 0x4 - core index']
  #allocation1 [shape = 'u32[144,128]{1,0:T(1,128)}', space=vmem, size = 0x12000, scoped, tag = 'internal scratch']
  %s0 = inlined_call_operand.vmem [shape: f32[32,32], index: 0, kind: input, shape index: {}]
  %s1 = inlined_call_operand.hbm [shape: f32[128,128], index: 1, kind: input, shape index: {}]
  %s2 = inlined_call_operand.vmem [shape: f32[32,24], index: 2, kind: input, shape index: {}]
  %s3 = inlined_call_operand.hbm [shape: f32[24,128], index: 3, kind: input, shape index: {}]
  %s4 = inlined_call_operand.vmem [shape: f32[32,128], index: 4, kind: input, shape index: {}]
  %s5 = inlined_call_operand.hbm [shape: f32[32,128], index: 5, kind: output, shape index: {}]
  %s6 = sld [smem:[#allocation0]]
  $region45: #{tpu_custom_call.1} parent=0
    _
  %s8 = ssub.s32 1, %s6
  %s9 = scalar_select 0, %s8, %s6
  $region1: #{tpu_custom_call.1} parent=0
    #allocation2 [shape = 'u8[65536]{0}', space=vmem, size = 0x10000, scoped, tag = 'input window, operand 1, single buffered']
    #allocation3 [shape = 's32[1]{0}', space=sflag, size = 0x4, scoped, tag = 'scoped memory for tpu_custom_call.1']
    #allocation4 [shape = 's32[1]{0}', space=sflag, size = 0x4, scoped, tag = 'scoped memory for tpu_custom_call.1']
    #allocation5 [shape = 'u8[12288]{0}', space=vmem, size = 0x3000, scoped, tag = 'input window, operand 3, single buffered']
    #allocation6 [shape = 's32[1]{0}', space=sflag, size = 0x4, scoped, tag = 'scoped memory for tpu_custom_call.1']
    #allocation7 [shape = 'u8[16384]{0}', space=vmem, size = 0x4000, scoped, tag = 'output window, operand 0, single buffered']
    %10 = vsyncpa [#allocation3], 0
    %11 = vsyncpa [#allocation6], 0
    %12 = vsyncpa [#allocation4], 0
    // Predicated region
    $region2: #{tpu_custom_call.1} parent=1 // pred_check
      _
    $region3: #{tpu_custom_call.1} parent=1 // pred_check_branch
      %14 = sbr.rel (0) target = $region5
    $region4: #{tpu_custom_call.1} parent=1 // pred_region
      _
    $region5: #{tpu_custom_call.1} parent=1 // pred_fallthru
      _
    // Predicated region
    $region6: #{tpu_custom_call.1} parent=1 // pred_check
      _
    $region7: #{tpu_custom_call.1} parent=1 // pred_check_branch
      %16 = sbr.rel (0) target = $region9
    $region8: #{tpu_custom_call.1} parent=1 // pred_region
      %s18 = ssub.s32 2048, 2048
      %19 = vsyncadd [#allocation3], %s18
      %s20 = sshll.u32 [#allocation2], 4
      %s21 = int_to_ptr.vmem [resolvable:$true] %s20
      %26 = dma.hbm_to_vmem [thread:$0]  %s1, 2048, %s21, [#allocation3], 128, 128, 8
    $region9: #{tpu_custom_call.1} parent=1 // pred_fallthru
      _
    // Predicated region
    $region10: #{tpu_custom_call.1} parent=1 // pred_check
      _
    $region11: #{tpu_custom_call.1} parent=1 // pred_check_branch
      %28 = sbr.rel (0) target = $region13
    $region12: #{tpu_custom_call.1} parent=1 // pred_region
      _
    $region13: #{tpu_custom_call.1} parent=1 // pred_fallthru
      _
    // Predicated region
    $region14: #{tpu_custom_call.1} parent=1 // pred_check
      _
    $region15: #{tpu_custom_call.1} parent=1 // pred_check_branch
      %30 = sbr.rel (0) target = $region17
    $region16: #{tpu_custom_call.1} parent=1 // pred_region
      %s32 = ssub.s32 384, 384
      %33 = vsyncadd [#allocation6], %s32
      %s34 = sshll.u32 [#allocation5], 4
      %s35 = int_to_ptr.vmem [resolvable:$true] %s34
      %40 = dma.hbm_to_vmem [thread:$0]  %s3, 384, %s35, [#allocation6], 128, 128, 8
    $region17: #{tpu_custom_call.1} parent=1 // pred_fallthru
      _
    // Predicated region
    $region18: #{tpu_custom_call.1} parent=1 // pred_check
      _
    $region19: #{tpu_custom_call.1} parent=1 // pred_check_branch
      %42 = sbr.rel (0) target = $region21
    $region20: #{tpu_custom_call.1} parent=1 // pred_region
      _
    $region21: #{tpu_custom_call.1} parent=1 // pred_fallthru
      _
    // Predicated region
    $region22: #{tpu_custom_call.1} parent=1 // pred_check
      _
    $region23: #{tpu_custom_call.1} parent=1 // pred_check_branch
      %44 = sbr.rel (0) target = $region25
    $region24: #{tpu_custom_call.1} parent=1 // pred_region
      %45 = dma.done [#allocation3], 2048
    $region25: #{tpu_custom_call.1} parent=1 // pred_fallthru
      _
    // Predicated region
    $region26: #{tpu_custom_call.1} parent=1 // pred_check
      _
    $region27: #{tpu_custom_call.1} parent=1 // pred_check_branch
      %47 = sbr.rel (0) target = $region29
    $region28: #{tpu_custom_call.1} parent=1 // pred_region
      %48 = dma.done [#allocation6], 384
    $region29: #{tpu_custom_call.1} parent=1 // pred_fallthru
      _
    %v49 = vld [vmem:[%s0] sm:$0xff]
    %v50 = vld [vmem:[%s0 + $0x8] sm:$0xff]
    %v51 = vld [vmem:[%s0 + $0x10] sm:$0xff]
    %v52 = vld [vmem:[%s0 + $0x18] sm:$0xff]
    %v53 = vld [vmem:[#allocation2] sm:$0xff]
    %v54 = vld [vmem:[#allocation2 + $0x8] sm:$0xff]
    %v55 = vld [vmem:[#allocation2 + $0x10] sm:$0xff]
    %v56 = vld [vmem:[#allocation2 + $0x18] sm:$0xff]
    %v57 = vld [vmem:[#allocation2 + $0x20] sm:$0xff]
    %v58 = vld [vmem:[#allocation2 + $0x28] sm:$0xff]
    %v59 = vld [vmem:[#allocation2 + $0x30] sm:$0xff]
    %v60 = vld [vmem:[#allocation2 + $0x38] sm:$0xff]
    %v61 = vld [vmem:[#allocation2 + $0x40] sm:$0xff]
    %v62 = vld [vmem:[#allocation2 + $0x48] sm:$0xff]
    %v63 = vld [vmem:[#allocation2 + $0x50] sm:$0xff]
    %v64 = vld [vmem:[#allocation2 + $0x58] sm:$0xff]
    %v65 = vld [vmem:[#allocation2 + $0x60] sm:$0xff]
    %v66 = vld [vmem:[#allocation2 + $0x68] sm:$0xff]
    %v67 = vld [vmem:[#allocation2 + $0x70] sm:$0xff]
    %v68 = vld [vmem:[#allocation2 + $0x78] sm:$0xff]
    %v69 = vld [vmem:[%s2] sm:$0xff]
    %v70 = vld [vmem:[%s2 + $0x8] sm:$0xff]
    %v71 = vld [vmem:[%s2 + $0x10] sm:$0xff]
    %v72 = vld [vmem:[%s2 + $0x18] sm:$0xff]
    %v73 = vld [vmem:[#allocation5] sm:$0xff]
    %v74 = vld [vmem:[#allocation5 + $0x8] sm:$0xff]
    %v75 = vld [vmem:[#allocation5 + $0x10] sm:$0xff]
    %vm76 = vcmask 195584
    %v78 = vsel %vm76, %v69, 0
    %v81 = vsel %vm76, %v70, 0
    %v84 = vsel %vm76, %v71, 0
    %v87 = vsel %vm76, %v72, 0
    %89 = vmatprep.subr.mxu0 0.0
    %90 = vmatpush1.msra.mxu0 %v73
    %91 = vmatprep.subr.mxu0 0.0
    %92 = vmatpush1.msra.mxu0 %v74
    %93 = vmatprep.subr.mxu0 0.0
    %94 = vmatpush1.msra.mxu0 %v75
    %95 = vmatprep.subr.mxu0 0.0
    %96 = vmatpush1.msra.mxu0 0.0
    %97 = vmatprep.subr.mxu0 0.0
    %98 = vmatpush1.msra.mxu0 0.0
    %99 = vmatprep.subr.mxu0 0.0
    %100 = vmatpush1.msra.mxu0 0.0
    %101 = vmatprep.subr.mxu0 0.0
    %102 = vmatpush1.msra.mxu0 0.0
    %103 = vmatprep.subr.mxu0 0.0
    %104 = vmatpush1.msra.mxu0 0.0
    %105 = vmatprep.subr.mxu0 0.0
    %106 = vmatpush1.msra.mxu0 0.0
    %107 = vmatprep.subr.mxu0 0.0
    %108 = vmatpush1.msra.mxu0 0.0
    %109 = vmatprep.subr.mxu0 0.0
    %110 = vmatpush1.msra.mxu0 0.0
    %111 = vmatprep.subr.mxu0 0.0
    %112 = vmatpush1.msra.mxu0 0.0
    %113 = vmatprep.subr.mxu0 0.0
    %114 = vmatpush1.msra.mxu0 0.0
    %115 = vmatprep.subr.mxu0 0.0
    %116 = vmatpush1.msra.mxu0 0.0
    %117 = vmatprep.subr.mxu0 0.0
    %118 = vmatpush1.msra.mxu0 0.0
    %119 = vmatprep.subr.mxu0 0.0
    %120 = vmatpush1.msra.mxu0 0.0
    %121 = vmatprep.subr.mxu0 0.0
    %122 = vmatpush1.msra.mxu0 0.0
    %123 = vmatprep.subr.mxu0 0.0
    %124 = vmatpush1.msra.mxu0 0.0
    %125 = vmatprep.subr.mxu0 0.0
    %126 = vmatpush1.msra.mxu0 0.0
    %127 = vmatprep.subr.mxu0 0.0
    %128 = vmatpush1.msra.mxu0 0.0
    %129 = vmatprep.subr.mxu0 0.0
    %130 = vmatpush1.msra.mxu0 0.0
    %131 = vmatprep.subr.mxu0 0.0
    %132 = vmatpush1.msra.mxu0 0.0
    %133 = vmatprep.subr.mxu0 0.0
    %134 = vmatpush1.msra.mxu0 0.0
    %135 = vmatprep.subr.mxu0 0.0
    %136 = vmatpush1.msra.mxu0 0.0
    %137 = vmatprep.subr.mxu0 0.0
    %138 = vmatpush1.msra.mxu0 0.0
    %139 = vmatprep.subr.mxu0 0.0
    %140 = vmatpush1.msra.mxu0 0.0
    %141 = vmatprep.subr.mxu0 0.0
    %142 = vmatpush1.msra.mxu0 0.0
    %143 = vmatprep.subr.mxu0 0.0
    %144 = vmatpush1.msra.mxu0 0.0
    %145 = vmatprep.subr.mxu0 0.0
    %146 = vmatpush1.msra.mxu0 0.0
    %147 = vmatprep.subr.mxu0 0.0
    %148 = vmatpush1.msra.mxu0 0.0
    %149 = vmatprep.subr.mxu0 0.0
    %150 = vmatpush1.msra.mxu0 0.0
    %151 = vmatprep.subr.mxu0 0.0
    %152 = vmatpush1.msra.mxu0 0.0
    %153 = vmatprep.mubr.f32.mxu0 0.0
    %154 = vmatmul.mubr.f32.gmra.mrb[0].mxu0 %v78
    %v155 = vpop.f32.mrb[0].mxu0
    %v156 = vadd.f32 0.0, %v155
    %v157 = vpop.f32.mrb[0].mxu0
    %158 = vmatprep.mubr.f32.mxu0 0.0
    %159 = vmatmul.mubr.f32.gmra.mrb[0].mxu0 %v81
    %v160 = vpop.f32.mrb[0].mxu0
    %v161 = vadd.f32 0.0, %v160
    %v162 = vpop.f32.mrb[0].mxu0
    %163 = vmatprep.mubr.f32.mxu0 0.0
    %164 = vmatmul.mubr.f32.gmra.mrb[0].mxu0 %v84
    %v165 = vpop.f32.mrb[0].mxu0
    %v166 = vadd.f32 0.0, %v165
    %v167 = vpop.f32.mrb[0].mxu0
    %168 = vmatprep.mubr.f32.mxu0 0.0
    %169 = vmatmul.mubr.f32.gmra.mrb[0].mxu0 %v87
    %v170 = vpop.f32.mrb[0].mxu0
    %v171 = vadd.f32 0.0, %v170
    %v172 = vpop.f32.mrb[0].mxu0
    %173 = vdwg.mxu0
    %v174 = vld [vmem:[%s4] sm:$0xff]
    %v175 = vld [vmem:[%s4 + $0x8] sm:$0xff]
    %v176 = vld [vmem:[%s4 + $0x10] sm:$0xff]
    %v177 = vld [vmem:[%s4 + $0x18] sm:$0xff]
    // While loop
    $region30: #{tpu_custom_call.1} parent=1 // loop_pre_header
      _
    $region31: #{tpu_custom_call.1} parent=1 // loop_header
      %s179 = sphi 0, %s1964
      %v180 = vphi %v174, %v1940
      %v181 = vphi %v175, %v1941
      %v182 = vphi %v176, %v1942
      %v183 = vphi %v177, %v1943
      %s184 = sphi inf, %s1963
      %p185 = scmp.lt.s32.totalorder %s179, 50
      %p186 = scmp.ge.f32.partialorder %s184, 3e-06
      %p187 = pnand %p185, %p186
      %p188 = pneg %p187
    $region32: #{tpu_custom_call.1} parent=1 // loop_header_branch
      %190 = sbr.rel (%p187) target = $region36
    $region33: #{tpu_custom_call.1} parent=1 // loop_body
      %vm191 = vcmask 261120
      %v193 = vsel %vm191, %v49, 0
      %v196 = vsel %vm191, %v50, 0
      %v199 = vsel %vm191, %v51, 0
      %v202 = vsel %vm191, %v52, 0
      %204 = vmatprep.subr.mxu0 0.0
      %205 = vmatpush1.msra.mxu0 %v180
      %206 = vmatprep.subr.mxu0 0.0
      %207 = vmatpush1.msra.mxu0 %v181
      %208 = vmatprep.subr.mxu0 0.0
      %209 = vmatpush1.msra.mxu0 %v182
      %210 = vmatprep.subr.mxu0 0.0
      %211 = vmatpush1.msra.mxu0 %v183
      %212 = vmatprep.subr.mxu0 0.0
      %213 = vmatpush1.msra.mxu0 0.0
      %214 = vmatprep.subr.mxu0 0.0
      %215 = vmatpush1.msra.mxu0 0.0
      %216 = vmatprep.subr.mxu0 0.0
      %217 = vmatpush1.msra.mxu0 0.0
      %218 = vmatprep.subr.mxu0 0.0
      %219 = vmatpush1.msra.mxu0 0.0
      %220 = vmatprep.subr.mxu0 0.0
      %221 = vmatpush1.msra.mxu0 0.0
      %222 = vmatprep.subr.mxu0 0.0
      %223 = vmatpush1.msra.mxu0 0.0
      %224 = vmatprep.subr.mxu0 0.0
      %225 = vmatpush1.msra.mxu0 0.0
      %226 = vmatprep.subr.mxu0 0.0
      %227 = vmatpush1.msra.mxu0 0.0
      %228 = vmatprep.subr.mxu0 0.0
      %229 = vmatpush1.msra.mxu0 0.0
      %230 = vmatprep.subr.mxu0 0.0
      %231 = vmatpush1.msra.mxu0 0.0
      %232 = vmatprep.subr.mxu0 0.0
      %233 = vmatpush1.msra.mxu0 0.0
      %234 = vmatprep.subr.mxu0 0.0
      %235 = vmatpush1.msra.mxu0 0.0
      %236 = vmatprep.subr.mxu0 0.0
      %237 = vmatpush1.msra.mxu0 0.0
      %238 = vmatprep.subr.mxu0 0.0
      %239 = vmatpush1.msra.mxu0 0.0
      %240 = vmatprep.subr.mxu0 0.0
      %241 = vmatpush1.msra.mxu0 0.0
      %242 = vmatprep.subr.mxu0 0.0
      %243 = vmatpush1.msra.mxu0 0.0
      %244 = vmatprep.subr.mxu0 0.0
      %245 = vmatpush1.msra.mxu0 0.0
      %246 = vmatprep.subr.mxu0 0.0
      %247 = vmatpush1.msra.mxu0 0.0
      %248 = vmatprep.subr.mxu0 0.0
      %249 = vmatpush1.msra.mxu0 0.0
      %250 = vmatprep.subr.mxu0 0.0
      %251 = vmatpush1.msra.mxu0 0.0
      %252 = vmatprep.subr.mxu0 0.0
      %253 = vmatpush1.msra.mxu0 0.0
      %254 = vmatprep.subr.mxu0 0.0
      %255 = vmatpush1.msra.mxu0 0.0
      %256 = vmatprep.subr.mxu0 0.0
      %257 = vmatpush1.msra.mxu0 0.0
      %258 = vmatprep.subr.mxu0 0.0
      %259 = vmatpush1.msra.mxu0 0.0
      %260 = vmatprep.subr.mxu0 0.0
      %261 = vmatpush1.msra.mxu0 0.0
      %262 = vmatprep.subr.mxu0 0.0
      %263 = vmatpush1.msra.mxu0 0.0
      %264 = vmatprep.subr.mxu0 0.0
      %265 = vmatpush1.msra.mxu0 0.0
      %266 = vmatprep.subr.mxu0 0.0
      %267 = vmatpush1.msra.mxu0 0.0
      %268 = vmatprep.mubr.f32.mxu0 0.0
      %269 = vmatmul.mubr.f32.gmra.mrb[0].mxu0 %v193
      %v270 = vpop.f32.mrb[0].mxu0
      %v271 = vadd.f32 0.0, %v270
      %v272 = vpop.f32.mrb[0].mxu0
      %273 = vmatprep.mubr.f32.mxu0 0.0
      %274 = vmatmul.mubr.f32.gmra.mrb[0].mxu0 %v196
      %v275 = vpop.f32.mrb[0].mxu0
      %v276 = vadd.f32 0.0, %v275
      %v277 = vpop.f32.mrb[0].mxu0
      %278 = vmatprep.mubr.f32.mxu0 0.0
      %279 = vmatmul.mubr.f32.gmra.mrb[0].mxu0 %v199
      %v280 = vpop.f32.mrb[0].mxu0
      %v281 = vadd.f32 0.0, %v280
      %v282 = vpop.f32.mrb[0].mxu0
      %283 = vmatprep.mubr.f32.mxu0 0.0
      %284 = vmatmul.mubr.f32.gmra.mrb[0].mxu0 %v202
      %v285 = vpop.f32.mrb[0].mxu0
      %v286 = vadd.f32 0.0, %v285
      %v287 = vpop.f32.mrb[0].mxu0
      %288 = vdwg.mxu0
      %289 = vmatprep.subr.mxu0 0.0
      %290 = vmatpush1.msra.mxu0 %v53
      %291 = vmatprep.subr.mxu0 0.0
      %292 = vmatpush1.msra.mxu0 %v54
      %293 = vmatprep.subr.mxu0 0.0
      %294 = vmatpush1.msra.mxu0 %v55
      %295 = vmatprep.subr.mxu0 0.0
      %296 = vmatpush1.msra.mxu0 %v56
      %297 = vmatprep.subr.mxu0 0.0
      %298 = vmatpush1.msra.mxu0 %v57
      %299 = vmatprep.subr.mxu0 0.0
      %300 = vmatpush1.msra.mxu0 %v58
      %301 = vmatprep.subr.mxu0 0.0
      %302 = vmatpush1.msra.mxu0 %v59
      %303 = vmatprep.subr.mxu0 0.0
      %304 = vmatpush1.msra.mxu0 %v60
      %305 = vmatprep.subr.mxu0 0.0
      %306 = vmatpush1.msra.mxu0 %v61
      %307 = vmatprep.subr.mxu0 0.0
      %308 = vmatpush1.msra.mxu0 %v62
      %309 = vmatprep.subr.mxu0 0.0
      %310 = vmatpush1.msra.mxu0 %v63
      %311 = vmatprep.subr.mxu0 0.0
      %312 = vmatpush1.msra.mxu0 %v64
      %313 = vmatprep.subr.mxu0 0.0
      %314 = vmatpush1.msra.mxu0 %v65
      %315 = vmatprep.subr.mxu0 0.0
      %316 = vmatpush1.msra.mxu0 %v66
      %317 = vmatprep.subr.mxu0 0.0
      %318 = vmatpush1.msra.mxu0 %v67
      %319 = vmatprep.subr.mxu0 0.0
      %320 = vmatpush1.msra.mxu0 %v68
      %321 = vmatprep.subr.mxu0 0.0
      %322 = vmatpush1.msra.mxu0 0.0
      %323 = vmatprep.subr.mxu0 0.0
      %324 = vmatpush1.msra.mxu0 0.0
      %325 = vmatprep.subr.mxu0 0.0
      %326 = vmatpush1.msra.mxu0 0.0
      %327 = vmatprep.subr.mxu0 0.0
      %328 = vmatpush1.msra.mxu0 0.0
      %329 = vmatprep.subr.mxu0 0.0
      %330 = vmatpush1.msra.mxu0 0.0
      %331 = vmatprep.subr.mxu0 0.0
      %332 = vmatpush1.msra.mxu0 0.0
      %333 = vmatprep.subr.mxu0 0.0
      %334 = vmatpush1.msra.mxu0 0.0
      %335 = vmatprep.subr.mxu0 0.0
      %336 = vmatpush1.msra.mxu0 0.0
      %337 = vmatprep.subr.mxu0 0.0
      %338 = vmatpush1.msra.mxu0 0.0
      %339 = vmatprep.subr.mxu0 0.0
      %340 = vmatpush1.msra.mxu0 0.0
      %341 = vmatprep.subr.mxu0 0.0
      %342 = vmatpush1.msra.mxu0 0.0
      %343 = vmatprep.subr.mxu0 0.0
      %344 = vmatpush1.msra.mxu0 0.0
      %345 = vmatprep.subr.mxu0 0.0
      %346 = vmatpush1.msra.mxu0 0.0
      %347 = vmatprep.subr.mxu0 0.0
      %348 = vmatpush1.msra.mxu0 0.0
      %349 = vmatprep.subr.mxu0 0.0
      %350 = vmatpush1.msra.mxu0 0.0
      %351 = vmatprep.subr.mxu0 0.0
      %352 = vmatpush1.msra.mxu0 0.0
      %353 = vmatprep.mubr.f32.mxu0 0.0
      %354 = vmatmul.mubr.f32.gmra.mrb[0].mxu0 %v271
      %v355 = vpop.f32.mrb[0].mxu0
      %v356 = vadd.f32 %v156, %v355
      %v357 = vpop.f32.mrb[0].mxu0
      %358 = vmatprep.mubr.f32.mxu0 0.0
      %359 = vmatmul.mubr.f32.gmra.mrb[0].mxu0 %v276
      %v360 = vpop.f32.mrb[0].mxu0
      %v361 = vadd.f32 %v161, %v360
      %v362 = vpop.f32.mrb[0].mxu0
      %363 = vmatprep.mubr.f32.mxu0 0.0
      %364 = vmatmul.mubr.f32.gmra.mrb[0].mxu0 %v281
      %v365 = vpop.f32.mrb[0].mxu0
      %v366 = vadd.f32 %v166, %v365
      %v367 = vpop.f32.mrb[0].mxu0
      %368 = vmatprep.mubr.f32.mxu0 0.0
      %369 = vmatmul.mubr.f32.gmra.mrb[0].mxu0 %v286
      %v370 = vpop.f32.mrb[0].mxu0
      %v371 = vadd.f32 %v171, %v370
      %v372 = vpop.f32.mrb[0].mxu0
      %373 = vdwg.mxu0
      %v374 = vmax.f32 %v356, 0.0
      %v375 = vmax.f32 %v361, 0.0
      %v376 = vmax.f32 %v366, 0.0
      %v377 = vmax.f32 %v371, 0.0
      %378 = vmatprep.subr.mxu0 0.0
      %379 = vmatpush1.msra.mxu0 %v374
      %380 = vmatprep.subr.mxu0 0.0
      %381 = vmatpush1.msra.mxu0 %v375
      %382 = vmatprep.subr.mxu0 0.0
      %383 = vmatpush1.msra.mxu0 %v376
      %384 = vmatprep.subr.mxu0 0.0
      %385 = vmatpush1.msra.mxu0 %v377
      %386 = vmatprep.subr.mxu0 0.0
      %387 = vmatpush1.msra.mxu0 0.0
      %388 = vmatprep.subr.mxu0 0.0
      %389 = vmatpush1.msra.mxu0 0.0
      %390 = vmatprep.subr.mxu0 0.0
      %391 = vmatpush1.msra.mxu0 0.0
      %392 = vmatprep.subr.mxu0 0.0
      %393 = vmatpush1.msra.mxu0 0.0
      %394 = vmatprep.subr.mxu0 0.0
      %395 = vmatpush1.msra.mxu0 0.0
      %396 = vmatprep.subr.mxu0 0.0
      %397 = vmatpush1.msra.mxu0 0.0
      %398 = vmatprep.subr.mxu0 0.0
      %399 = vmatpush1.msra.mxu0 0.0
      %400 = vmatprep.subr.mxu0 0.0
      %401 = vmatpush1.msra.mxu0 0.0
      %402 = vmatprep.subr.mxu0 0.0
      %403 = vmatpush1.msra.mxu0 0.0
      %404 = vmatprep.subr.mxu0 0.0
      %405 = vmatpush1.msra.mxu0 0.0
      %406 = vmatprep.subr.mxu0 0.0
      %407 = vmatpush1.msra.mxu0 0.0
      %408 = vmatprep.subr.mxu0 0.0
      %409 = vmatpush1.msra.mxu0 0.0
      %410 = vmatprep.subr.mxu0 0.0
      %411 = vmatpush1.msra.mxu0 0.0
      %412 = vmatprep.subr.mxu0 0.0
      %413 = vmatpush1.msra.mxu0 0.0
      %414 = vmatprep.subr.mxu0 0.0
      %415 = vmatpush1.msra.mxu0 0.0
      %416 = vmatprep.subr.mxu0 0.0
      %417 = vmatpush1.msra.mxu0 0.0
      %418 = vmatprep.subr.mxu0 0.0
      %419 = vmatpush1.msra.mxu0 0.0
      %420 = vmatprep.subr.mxu0 0.0
      %421 = vmatpush1.msra.mxu0 0.0
      %422 = vmatprep.subr.mxu0 0.0
      %423 = vmatpush1.msra.mxu0 0.0
      %424 = vmatprep.subr.mxu0 0.0
      %425 = vmatpush1.msra.mxu0 0.0
      %426 = vmatprep.subr.mxu0 0.0
      %427 = vmatpush1.msra.mxu0 0.0
      %428 = vmatprep.subr.mxu0 0.0
      %429 = vmatpush1.msra.mxu0 0.0
      %430 = vmatprep.subr.mxu0 0.0
      %431 = vmatpush1.msra.mxu0 0.0
      %432 = vmatprep.subr.mxu0 0.0
      %433 = vmatpush1.msra.mxu0 0.0
      %434 = vmatprep.subr.mxu0 0.0
      %435 = vmatpush1.msra.mxu0 0.0
      %436 = vmatprep.subr.mxu0 0.0
      %437 = vmatpush1.msra.mxu0 0.0
      %438 = vmatprep.subr.mxu0 0.0
      %439 = vmatpush1.msra.mxu0 0.0
      %440 = vmatprep.subr.mxu0 0.0
      %441 = vmatpush1.msra.mxu0 0.0
      %442 = vmatprep.mubr.f32.mxu0 0.0
      %443 = vmatmul.mubr.f32.gmra.mrb[0].mxu0 %v193
      %v444 = vpop.f32.mrb[0].mxu0
      %v445 = vadd.f32 0.0, %v444
      %v446 = vpop.f32.mrb[0].mxu0
      %447 = vmatprep.mubr.f32.mxu0 0.0
      %448 = vmatmul.mubr.f32.gmra.mrb[0].mxu0 %v196
      %v449 = vpop.f32.mrb[0].mxu0
      %v450 = vadd.f32 0.0, %v449
      %v451 = vpop.f32.mrb[0].mxu0
      %452 = vmatprep.mubr.f32.mxu0 0.0
      %453 = vmatmul.mubr.f32.gmra.mrb[0].mxu0 %v199
      %v454 = vpop.f32.mrb[0].mxu0
      %v455 = vadd.f32 0.0, %v454
      %v456 = vpop.f32.mrb[0].mxu0
      %457 = vmatprep.mubr.f32.mxu0 0.0
      %458 = vmatmul.mubr.f32.gmra.mrb[0].mxu0 %v202
      %v459 = vpop.f32.mrb[0].mxu0
      %v460 = vadd.f32 0.0, %v459
      %v461 = vpop.f32.mrb[0].mxu0
      %462 = vdwg.mxu0
      %463 = vmatprep.subr.mxu0 0.0
      %464 = vmatpush1.msra.mxu0 %v53
      %465 = vmatprep.subr.mxu0 0.0
      %466 = vmatpush1.msra.mxu0 %v54
      %467 = vmatprep.subr.mxu0 0.0
      %468 = vmatpush1.msra.mxu0 %v55
      %469 = vmatprep.subr.mxu0 0.0
      %470 = vmatpush1.msra.mxu0 %v56
      %471 = vmatprep.subr.mxu0 0.0
      %472 = vmatpush1.msra.mxu0 %v57
      %473 = vmatprep.subr.mxu0 0.0
      %474 = vmatpush1.msra.mxu0 %v58
      %475 = vmatprep.subr.mxu0 0.0
      %476 = vmatpush1.msra.mxu0 %v59
      %477 = vmatprep.subr.mxu0 0.0
      %478 = vmatpush1.msra.mxu0 %v60
      %479 = vmatprep.subr.mxu0 0.0
      %480 = vmatpush1.msra.mxu0 %v61
      %481 = vmatprep.subr.mxu0 0.0
      %482 = vmatpush1.msra.mxu0 %v62
      %483 = vmatprep.subr.mxu0 0.0
      %484 = vmatpush1.msra.mxu0 %v63
      %485 = vmatprep.subr.mxu0 0.0
      %486 = vmatpush1.msra.mxu0 %v64
      %487 = vmatprep.subr.mxu0 0.0
      %488 = vmatpush1.msra.mxu0 %v65
      %489 = vmatprep.subr.mxu0 0.0
      %490 = vmatpush1.msra.mxu0 %v66
      %491 = vmatprep.subr.mxu0 0.0
      %492 = vmatpush1.msra.mxu0 %v67
      %493 = vmatprep.subr.mxu0 0.0
      %494 = vmatpush1.msra.mxu0 %v68
      %495 = vmatprep.subr.mxu0 0.0
      %496 = vmatpush1.msra.mxu0 0.0
      %497 = vmatprep.subr.mxu0 0.0
      %498 = vmatpush1.msra.mxu0 0.0
      %499 = vmatprep.subr.mxu0 0.0
      %500 = vmatpush1.msra.mxu0 0.0
      %501 = vmatprep.subr.mxu0 0.0
      %502 = vmatpush1.msra.mxu0 0.0
      %503 = vmatprep.subr.mxu0 0.0
      %504 = vmatpush1.msra.mxu0 0.0
      %505 = vmatprep.subr.mxu0 0.0
      %506 = vmatpush1.msra.mxu0 0.0
      %507 = vmatprep.subr.mxu0 0.0
      %508 = vmatpush1.msra.mxu0 0.0
      %509 = vmatprep.subr.mxu0 0.0
      %510 = vmatpush1.msra.mxu0 0.0
      %511 = vmatprep.subr.mxu0 0.0
      %512 = vmatpush1.msra.mxu0 0.0
      %513 = vmatprep.subr.mxu0 0.0
      %514 = vmatpush1.msra.mxu0 0.0
      %515 = vmatprep.subr.mxu0 0.0
      %516 = vmatpush1.msra.mxu0 0.0
      %517 = vmatprep.subr.mxu0 0.0
      %518 = vmatpush1.msra.mxu0 0.0
      %519 = vmatprep.subr.mxu0 0.0
      %520 = vmatpush1.msra.mxu0 0.0
      %521 = vmatprep.subr.mxu0 0.0
      %522 = vmatpush1.msra.mxu0 0.0
      %523 = vmatprep.subr.mxu0 0.0
      %524 = vmatpush1.msra.mxu0 0.0
      %525 = vmatprep.subr.mxu0 0.0
      %526 = vmatpush1.msra.mxu0 0.0
      %527 = vmatprep.mubr.f32.mxu0 0.0
      %528 = vmatmul.mubr.f32.gmra.mrb[0].mxu0 %v445
      %v529 = vpop.f32.mrb[0].mxu0
      %v530 = vadd.f32 %v156, %v529
      %v531 = vpop.f32.mrb[0].mxu0
      %532 = vmatprep.mubr.f32.mxu0 0.0
      %533 = vmatmul.mubr.f32.gmra.mrb[0].mxu0 %v450
      %v534 = vpop.f32.mrb[0].mxu0
      %v535 = vadd.f32 %v161, %v534
      %v536 = vpop.f32.mrb[0].mxu0
      %537 = vmatprep.mubr.f32.mxu0 0.0
      %538 = vmatmul.mubr.f32.gmra.mrb[0].mxu0 %v455
      %v539 = vpop.f32.mrb[0].mxu0
      %v540 = vadd.f32 %v166, %v539
      %v541 = vpop.f32.mrb[0].mxu0
      %542 = vmatprep.mubr.f32.mxu0 0.0
      %543 = vmatmul.mubr.f32.gmra.mrb[0].mxu0 %v460
      %v544 = vpop.f32.mrb[0].mxu0
      %v545 = vadd.f32 %v171, %v544
      %v546 = vpop.f32.mrb[0].mxu0
      %547 = vdwg.mxu0
      %v548 = vmax.f32 %v530, 0.0
      %v549 = vmax.f32 %v535, 0.0
      %v550 = vmax.f32 %v540, 0.0
      %v551 = vmax.f32 %v545, 0.0
      %552 = vmatprep.subr.mxu0 0.0
      %553 = vmatpush1.msra.mxu0 %v548
      %554 = vmatprep.subr.mxu0 0.0
      %555 = vmatpush1.msra.mxu0 %v549
      %556 = vmatprep.subr.mxu0 0.0
      %557 = vmatpush1.msra.mxu0 %v550
      %558 = vmatprep.subr.mxu0 0.0
      %559 = vmatpush1.msra.mxu0 %v551
      %560 = vmatprep.subr.mxu0 0.0
      %561 = vmatpush1.msra.mxu0 0.0
      %562 = vmatprep.subr.mxu0 0.0
      %563 = vmatpush1.msra.mxu0 0.0
      %564 = vmatprep.subr.mxu0 0.0
      %565 = vmatpush1.msra.mxu0 0.0
      %566 = vmatprep.subr.mxu0 0.0
      %567 = vmatpush1.msra.mxu0 0.0
      %568 = vmatprep.subr.mxu0 0.0
      %569 = vmatpush1.msra.mxu0 0.0
      %570 = vmatprep.subr.mxu0 0.0
      %571 = vmatpush1.msra.mxu0 0.0
      %572 = vmatprep.subr.mxu0 0.0
      %573 = vmatpush1.msra.mxu0 0.0
      %574 = vmatprep.subr.mxu0 0.0
      %575 = vmatpush1.msra.mxu0 0.0
      %576 = vmatprep.subr.mxu0 0.0
      %577 = vmatpush1.msra.mxu0 0.0
      %578 = vmatprep.subr.mxu0 0.0
      %579 = vmatpush1.msra.mxu0 0.0
      %580 = vmatprep.subr.mxu0 0.0
      %581 = vmatpush1.msra.mxu0 0.0
      %582 = vmatprep.subr.mxu0 0.0
      %583 = vmatpush1.msra.mxu0 0.0
      %584 = vmatprep.subr.mxu0 0.0
      %585 = vmatpush1.msra.mxu0 0.0
      %586 = vmatprep.subr.mxu0 0.0
      %587 = vmatpush1.msra.mxu0 0.0
      %588 = vmatprep.subr.mxu0 0.0
      %589 = vmatpush1.msra.mxu0 0.0
      %590 = vmatprep.subr.mxu0 0.0
      %591 = vmatpush1.msra.mxu0 0.0
      %592 = vmatprep.subr.mxu0 0.0
      %593 = vmatpush1.msra.mxu0 0.0
      %594 = vmatprep.subr.mxu0 0.0
      %595 = vmatpush1.msra.mxu0 0.0
      %596 = vmatprep.subr.mxu0 0.0
      %597 = vmatpush1.msra.mxu0 0.0
      %598 = vmatprep.subr.mxu0 0.0
      %599 = vmatpush1.msra.mxu0 0.0
      %600 = vmatprep.subr.mxu0 0.0
      %601 = vmatpush1.msra.mxu0 0.0
      %602 = vmatprep.subr.mxu0 0.0
      %603 = vmatpush1.msra.mxu0 0.0
      %604 = vmatprep.subr.mxu0 0.0
      %605 = vmatpush1.msra.mxu0 0.0
      %606 = vmatprep.subr.mxu0 0.0
      %607 = vmatpush1.msra.mxu0 0.0
      %608 = vmatprep.subr.mxu0 0.0
      %609 = vmatpush1.msra.mxu0 0.0
      %610 = vmatprep.subr.mxu0 0.0
      %611 = vmatpush1.msra.mxu0 0.0
      %612 = vmatprep.subr.mxu0 0.0
      %613 = vmatpush1.msra.mxu0 0.0
      %614 = vmatprep.subr.mxu0 0.0
      %615 = vmatpush1.msra.mxu0 0.0
      %616 = vmatprep.mubr.f32.mxu0 0.0
      %617 = vmatmul.mubr.f32.gmra.mrb[0].mxu0 %v193
      %v618 = vpop.f32.mrb[0].mxu0
      %v619 = vadd.f32 0.0, %v618
      %v620 = vpop.f32.mrb[0].mxu0
      %621 = vmatprep.mubr.f32.mxu0 0.0
      %622 = vmatmul.mubr.f32.gmra.mrb[0].mxu0 %v196
      %v623 = vpop.f32.mrb[0].mxu0
      %v624 = vadd.f32 0.0, %v623
      %v625 = vpop.f32.mrb[0].mxu0
      %626 = vmatprep.mubr.f32.mxu0 0.0
      %627 = vmatmul.mubr.f32.gmra.mrb[0].mxu0 %v199
      %v628 = vpop.f32.mrb[0].mxu0
      %v629 = vadd.f32 0.0, %v628
      %v630 = vpop.f32.mrb[0].mxu0
      %631 = vmatprep.mubr.f32.mxu0 0.0
      %632 = vmatmul.mubr.f32.gmra.mrb[0].mxu0 %v202
      %v633 = vpop.f32.mrb[0].mxu0
      %v634 = vadd.f32 0.0, %v633
      %v635 = vpop.f32.mrb[0].mxu0
      %636 = vdwg.mxu0
      %637 = vmatprep.subr.mxu0 0.0
      %638 = vmatpush1.msra.mxu0 %v53
      %639 = vmatprep.subr.mxu0 0.0
      %640 = vmatpush1.msra.mxu0 %v54
      %641 = vmatprep.subr.mxu0 0.0
      %642 = vmatpush1.msra.mxu0 %v55
      %643 = vmatprep.subr.mxu0 0.0
      %644 = vmatpush1.msra.mxu0 %v56
      %645 = vmatprep.subr.mxu0 0.0
      %646 = vmatpush1.msra.mxu0 %v57
      %647 = vmatprep.subr.mxu0 0.0
      %648 = vmatpush1.msra.mxu0 %v58
      %649 = vmatprep.subr.mxu0 0.0
      %650 = vmatpush1.msra.mxu0 %v59
      %651 = vmatprep.subr.mxu0 0.0
      %652 = vmatpush1.msra.mxu0 %v60
      %653 = vmatprep.subr.mxu0 0.0
      %654 = vmatpush1.msra.mxu0 %v61
      %655 = vmatprep.subr.mxu0 0.0
      %656 = vmatpush1.msra.mxu0 %v62
      %657 = vmatprep.subr.mxu0 0.0
      %658 = vmatpush1.msra.mxu0 %v63
      %659 = vmatprep.subr.mxu0 0.0
      %660 = vmatpush1.msra.mxu0 %v64
      %661 = vmatprep.subr.mxu0 0.0
      %662 = vmatpush1.msra.mxu0 %v65
      %663 = vmatprep.subr.mxu0 0.0
      %664 = vmatpush1.msra.mxu0 %v66
      %665 = vmatprep.subr.mxu0 0.0
      %666 = vmatpush1.msra.mxu0 %v67
      %667 = vmatprep.subr.mxu0 0.0
      %668 = vmatpush1.msra.mxu0 %v68
      %669 = vmatprep.subr.mxu0 0.0
      %670 = vmatpush1.msra.mxu0 0.0
      %671 = vmatprep.subr.mxu0 0.0
      %672 = vmatpush1.msra.mxu0 0.0
      %673 = vmatprep.subr.mxu0 0.0
      %674 = vmatpush1.msra.mxu0 0.0
      %675 = vmatprep.subr.mxu0 0.0
      %676 = vmatpush1.msra.mxu0 0.0
      %677 = vmatprep.subr.mxu0 0.0
      %678 = vmatpush1.msra.mxu0 0.0
      %679 = vmatprep.subr.mxu0 0.0
      %680 = vmatpush1.msra.mxu0 0.0
      %681 = vmatprep.subr.mxu0 0.0
      %682 = vmatpush1.msra.mxu0 0.0
      %683 = vmatprep.subr.mxu0 0.0
      %684 = vmatpush1.msra.mxu0 0.0
      %685 = vmatprep.subr.mxu0 0.0
      %686 = vmatpush1.msra.mxu0 0.0
      %687 = vmatprep.subr.mxu0 0.0
      %688 = vmatpush1.msra.mxu0 0.0
      %689 = vmatprep.subr.mxu0 0.0
      %690 = vmatpush1.msra.mxu0 0.0
      %691 = vmatprep.subr.mxu0 0.0
      %692 = vmatpush1.msra.mxu0 0.0
      %693 = vmatprep.subr.mxu0 0.0
      %694 = vmatpush1.msra.mxu0 0.0
      %695 = vmatprep.subr.mxu0 0.0
      %696 = vmatpush1.msra.mxu0 0.0
      %697 = vmatprep.subr.mxu0 0.0
      %698 = vmatpush1.msra.mxu0 0.0
      %699 = vmatprep.subr.mxu0 0.0
      %700 = vmatpush1.msra.mxu0 0.0
      %701 = vmatprep.mubr.f32.mxu0 0.0
      %702 = vmatmul.mubr.f32.gmra.mrb[0].mxu0 %v619
      %v703 = vpop.f32.mrb[0].mxu0
      %v704 = vadd.f32 %v156, %v703
      %v705 = vpop.f32.mrb[0].mxu0
      %706 = vmatprep.mubr.f32.mxu0 0.0
      %707 = vmatmul.mubr.f32.gmra.mrb[0].mxu0 %v624
      %v708 = vpop.f32.mrb[0].mxu0
      %v709 = vadd.f32 %v161, %v708
      %v710 = vpop.f32.mrb[0].mxu0
      %711 = vmatprep.mubr.f32.mxu0 0.0
      %712 = vmatmul.mubr.f32.gmra.mrb[0].mxu0 %v629
      %v713 = vpop.f32.mrb[0].mxu0
      %v714 = vadd.f32 %v166, %v713
      %v715 = vpop.f32.mrb[0].mxu0
      %716 = vmatprep.mubr.f32.mxu0 0.0
      %717 = vmatmul.mubr.f32.gmra.mrb[0].mxu0 %v634
      %v718 = vpop.f32.mrb[0].mxu0
      %v719 = vadd.f32 %v171, %v718
      %v720 = vpop.f32.mrb[0].mxu0
      %721 = vdwg.mxu0
      %v722 = vmax.f32 %v704, 0.0
      %v723 = vmax.f32 %v709, 0.0
      %v724 = vmax.f32 %v714, 0.0
      %v725 = vmax.f32 %v719, 0.0
      %726 = vmatprep.subr.mxu0 0.0
      %727 = vmatpush1.msra.mxu0 %v722
      %728 = vmatprep.subr.mxu0 0.0
      %729 = vmatpush1.msra.mxu0 %v723
      %730 = vmatprep.subr.mxu0 0.0
      %731 = vmatpush1.msra.mxu0 %v724
      %732 = vmatprep.subr.mxu0 0.0
      %733 = vmatpush1.msra.mxu0 %v725
      %734 = vmatprep.subr.mxu0 0.0
      %735 = vmatpush1.msra.mxu0 0.0
      %736 = vmatprep.subr.mxu0 0.0
      %737 = vmatpush1.msra.mxu0 0.0
      %738 = vmatprep.subr.mxu0 0.0
      %739 = vmatpush1.msra.mxu0 0.0
      %740 = vmatprep.subr.mxu0 0.0
      %741 = vmatpush1.msra.mxu0 0.0
      %742 = vmatprep.subr.mxu0 0.0
      %743 = vmatpush1.msra.mxu0 0.0
      %744 = vmatprep.subr.mxu0 0.0
      %745 = vmatpush1.msra.mxu0 0.0
      %746 = vmatprep.subr.mxu0 0.0
      %747 = vmatpush1.msra.mxu0 0.0
      %748 = vmatprep.subr.mxu0 0.0
      %749 = vmatpush1.msra.mxu0 0.0
      %750 = vmatprep.subr.mxu0 0.0
      %751 = vmatpush1.msra.mxu0 0.0
      %752 = vmatprep.subr.mxu0 0.0
      %753 = vmatpush1.msra.mxu0 0.0
      %754 = vmatprep.subr.mxu0 0.0
      %755 = vmatpush1.msra.mxu0 0.0
      %756 = vmatprep.subr.mxu0 0.0
      %757 = vmatpush1.msra.mxu0 0.0
      %758 = vmatprep.subr.mxu0 0.0
      %759 = vmatpush1.msra.mxu0 0.0
      %760 = vmatprep.subr.mxu0 0.0
      %761 = vmatpush1.msra.mxu0 0.0
      %762 = vmatprep.subr.mxu0 0.0
      %763 = vmatpush1.msra.mxu0 0.0
      %764 = vmatprep.subr.mxu0 0.0
      %765 = vmatpush1.msra.mxu0 0.0
      %766 = vmatprep.subr.mxu0 0.0
      %767 = vmatpush1.msra.mxu0 0.0
      %768 = vmatprep.subr.mxu0 0.0
      %769 = vmatpush1.msra.mxu0 0.0
      %770 = vmatprep.subr.mxu0 0.0
      %771 = vmatpush1.msra.mxu0 0.0
      %772 = vmatprep.subr.mxu0 0.0
      %773 = vmatpush1.msra.mxu0 0.0
      %774 = vmatprep.subr.mxu0 0.0
      %775 = vmatpush1.msra.mxu0 0.0
      %776 = vmatprep.subr.mxu0 0.0
      %777 = vmatpush1.msra.mxu0 0.0
      %778 = vmatprep.subr.mxu0 0.0
      %779 = vmatpush1.msra.mxu0 0.0
      %780 = vmatprep.subr.mxu0 0.0
      %781 = vmatpush1.msra.mxu0 0.0
      %782 = vmatprep.subr.mxu0 0.0
      %783 = vmatpush1.msra.mxu0 0.0
      %784 = vmatprep.subr.mxu0 0.0
      %785 = vmatpush1.msra.mxu0 0.0
      %786 = vmatprep.subr.mxu0 0.0
      %787 = vmatpush1.msra.mxu0 0.0
      %788 = vmatprep.subr.mxu0 0.0
      %789 = vmatpush1.msra.mxu0 0.0
      %790 = vmatprep.mubr.f32.mxu0 0.0
      %791 = vmatmul.mubr.f32.gmra.mrb[0].mxu0 %v193
      %v792 = vpop.f32.mrb[0].mxu0
      %v793 = vadd.f32 0.0, %v792
      %v794 = vpop.f32.mrb[0].mxu0
      %795 = vmatprep.mubr.f32.mxu0 0.0
      %796 = vmatmul.mubr.f32.gmra.mrb[0].mxu0 %v196
      %v797 = vpop.f32.mrb[0].mxu0
      %v798 = vadd.f32 0.0, %v797
      %v799 = vpop.f32.mrb[0].mxu0
      %800 = vmatprep.mubr.f32.mxu0 0.0
      %801 = vmatmul.mubr.f32.gmra.mrb[0].mxu0 %v199
      %v802 = vpop.f32.mrb[0].mxu0
      %v803 = vadd.f32 0.0, %v802
      %v804 = vpop.f32.mrb[0].mxu0
      %805 = vmatprep.mubr.f32.mxu0 0.0
      %806 = vmatmul.mubr.f32.gmra.mrb[0].mxu0 %v202
      %v807 = vpop.f32.mrb[0].mxu0
      %v808 = vadd.f32 0.0, %v807
      %v809 = vpop.f32.mrb[0].mxu0
      %810 = vdwg.mxu0
      %811 = vmatprep.subr.mxu0 0.0
      %812 = vmatpush1.msra.mxu0 %v53
      %813 = vmatprep.subr.mxu0 0.0
      %814 = vmatpush1.msra.mxu0 %v54
      %815 = vmatprep.subr.mxu0 0.0
      %816 = vmatpush1.msra.mxu0 %v55
      %817 = vmatprep.subr.mxu0 0.0
      %818 = vmatpush1.msra.mxu0 %v56
      %819 = vmatprep.subr.mxu0 0.0
      %820 = vmatpush1.msra.mxu0 %v57
      %821 = vmatprep.subr.mxu0 0.0
      %822 = vmatpush1.msra.mxu0 %v58
      %823 = vmatprep.subr.mxu0 0.0
      %824 = vmatpush1.msra.mxu0 %v59
      %825 = vmatprep.subr.mxu0 0.0
      %826 = vmatpush1.msra.mxu0 %v60
      %827 = vmatprep.subr.mxu0 0.0
      %828 = vmatpush1.msra.mxu0 %v61
      %829 = vmatprep.subr.mxu0 0.0
      %830 = vmatpush1.msra.mxu0 %v62
      %831 = vmatprep.subr.mxu0 0.0
      %832 = vmatpush1.msra.mxu0 %v63
      %833 = vmatprep.subr.mxu0 0.0
      %834 = vmatpush1.msra.mxu0 %v64
      %835 = vmatprep.subr.mxu0 0.0
      %836 = vmatpush1.msra.mxu0 %v65
      %837 = vmatprep.subr.mxu0 0.0
      %838 = vmatpush1.msra.mxu0 %v66
      %839 = vmatprep.subr.mxu0 0.0
      %840 = vmatpush1.msra.mxu0 %v67
      %841 = vmatprep.subr.mxu0 0.0
      %842 = vmatpush1.msra.mxu0 %v68
      %843 = vmatprep.subr.mxu0 0.0
      %844 = vmatpush1.msra.mxu0 0.0
      %845 = vmatprep.subr.mxu0 0.0
      %846 = vmatpush1.msra.mxu0 0.0
      %847 = vmatprep.subr.mxu0 0.0
      %848 = vmatpush1.msra.mxu0 0.0
      %849 = vmatprep.subr.mxu0 0.0
      %850 = vmatpush1.msra.mxu0 0.0
      %851 = vmatprep.subr.mxu0 0.0
      %852 = vmatpush1.msra.mxu0 0.0
      %853 = vmatprep.subr.mxu0 0.0
      %854 = vmatpush1.msra.mxu0 0.0
      %855 = vmatprep.subr.mxu0 0.0
      %856 = vmatpush1.msra.mxu0 0.0
      %857 = vmatprep.subr.mxu0 0.0
      %858 = vmatpush1.msra.mxu0 0.0
      %859 = vmatprep.subr.mxu0 0.0
      %860 = vmatpush1.msra.mxu0 0.0
      %861 = vmatprep.subr.mxu0 0.0
      %862 = vmatpush1.msra.mxu0 0.0
      %863 = vmatprep.subr.mxu0 0.0
      %864 = vmatpush1.msra.mxu0 0.0
      %865 = vmatprep.subr.mxu0 0.0
      %866 = vmatpush1.msra.mxu0 0.0
      %867 = vmatprep.subr.mxu0 0.0
      %868 = vmatpush1.msra.mxu0 0.0
      %869 = vmatprep.subr.mxu0 0.0
      %870 = vmatpush1.msra.mxu0 0.0
      %871 = vmatprep.subr.mxu0 0.0
      %872 = vmatpush1.msra.mxu0 0.0
      %873 = vmatprep.subr.mxu0 0.0
      %874 = vmatpush1.msra.mxu0 0.0
      %875 = vmatprep.mubr.f32.mxu0 0.0
      %876 = vmatmul.mubr.f32.gmra.mrb[0].mxu0 %v793
      %v877 = vpop.f32.mrb[0].mxu0
      %v878 = vadd.f32 %v156, %v877
      %v879 = vpop.f32.mrb[0].mxu0
      %880 = vmatprep.mubr.f32.mxu0 0.0
      %881 = vmatmul.mubr.f32.gmra.mrb[0].mxu0 %v798
      %v882 = vpop.f32.mrb[0].mxu0
      %v883 = vadd.f32 %v161, %v882
      %v884 = vpop.f32.mrb[0].mxu0
      %885 = vmatprep.mubr.f32.mxu0 0.0
      %886 = vmatmul.mubr.f32.gmra.mrb[0].mxu0 %v803
      %v887 = vpop.f32.mrb[0].mxu0
      %v888 = vadd.f32 %v166, %v887
      %v889 = vpop.f32.mrb[0].mxu0
      %890 = vmatprep.mubr.f32.mxu0 0.0
      %891 = vmatmul.mubr.f32.gmra.mrb[0].mxu0 %v808
      %v892 = vpop.f32.mrb[0].mxu0
      %v893 = vadd.f32 %v171, %v892
      %v894 = vpop.f32.mrb[0].mxu0
      %895 = vdwg.mxu0
      %v896 = vmax.f32 %v878, 0.0
      %v897 = vmax.f32 %v883, 0.0
      %v898 = vmax.f32 %v888, 0.0
      %v899 = vmax.f32 %v893, 0.0
      %900 = vmatprep.subr.mxu0 0.0
      %901 = vmatpush1.msra.mxu0 %v896
      %902 = vmatprep.subr.mxu0 0.0
      %903 = vmatpush1.msra.mxu0 %v897
      %904 = vmatprep.subr.mxu0 0.0
      %905 = vmatpush1.msra.mxu0 %v898
      %906 = vmatprep.subr.mxu0 0.0
      %907 = vmatpush1.msra.mxu0 %v899
      %908 = vmatprep.subr.mxu0 0.0
      %909 = vmatpush1.msra.mxu0 0.0
      %910 = vmatprep.subr.mxu0 0.0
      %911 = vmatpush1.msra.mxu0 0.0
      %912 = vmatprep.subr.mxu0 0.0
      %913 = vmatpush1.msra.mxu0 0.0
      %914 = vmatprep.subr.mxu0 0.0
      %915 = vmatpush1.msra.mxu0 0.0
      %916 = vmatprep.subr.mxu0 0.0
      %917 = vmatpush1.msra.mxu0 0.0
      %918 = vmatprep.subr.mxu0 0.0
      %919 = vmatpush1.msra.mxu0 0.0
      %920 = vmatprep.subr.mxu0 0.0
      %921 = vmatpush1.msra.mxu0 0.0
      %922 = vmatprep.subr.mxu0 0.0
      %923 = vmatpush1.msra.mxu0 0.0
      %924 = vmatprep.subr.mxu0 0.0
      %925 = vmatpush1.msra.mxu0 0.0
      %926 = vmatprep.subr.mxu0 0.0
      %927 = vmatpush1.msra.mxu0 0.0
      %928 = vmatprep.subr.mxu0 0.0
      %929 = vmatpush1.msra.mxu0 0.0
      %930 = vmatprep.subr.mxu0 0.0
      %931 = vmatpush1.msra.mxu0 0.0
      %932 = vmatprep.subr.mxu0 0.0
      %933 = vmatpush1.msra.mxu0 0.0
      %934 = vmatprep.subr.mxu0 0.0
      %935 = vmatpush1.msra.mxu0 0.0
      %936 = vmatprep.subr.mxu0 0.0
      %937 = vmatpush1.msra.mxu0 0.0
      %938 = vmatprep.subr.mxu0 0.0
      %939 = vmatpush1.msra.mxu0 0.0
      %940 = vmatprep.subr.mxu0 0.0
      %941 = vmatpush1.msra.mxu0 0.0
      %942 = vmatprep.subr.mxu0 0.0
      %943 = vmatpush1.msra.mxu0 0.0
      %944 = vmatprep.subr.mxu0 0.0
      %945 = vmatpush1.msra.mxu0 0.0
      %946 = vmatprep.subr.mxu0 0.0
      %947 = vmatpush1.msra.mxu0 0.0
      %948 = vmatprep.subr.mxu0 0.0
      %949 = vmatpush1.msra.mxu0 0.0
      %950 = vmatprep.subr.mxu0 0.0
      %951 = vmatpush1.msra.mxu0 0.0
      %952 = vmatprep.subr.mxu0 0.0
      %953 = vmatpush1.msra.mxu0 0.0
      %954 = vmatprep.subr.mxu0 0.0
      %955 = vmatpush1.msra.mxu0 0.0
      %956 = vmatprep.subr.mxu0 0.0
      %957 = vmatpush1.msra.mxu0 0.0
      %958 = vmatprep.subr.mxu0 0.0
      %959 = vmatpush1.msra.mxu0 0.0
      %960 = vmatprep.subr.mxu0 0.0
      %961 = vmatpush1.msra.mxu0 0.0
      %962 = vmatprep.subr.mxu0 0.0
      %963 = vmatpush1.msra.mxu0 0.0
      %964 = vmatprep.mubr.f32.mxu0 0.0
      %965 = vmatmul.mubr.f32.gmra.mrb[0].mxu0 %v193
      %v966 = vpop.f32.mrb[0].mxu0
      %v967 = vadd.f32 0.0, %v966
      %v968 = vpop.f32.mrb[0].mxu0
      %969 = vmatprep.mubr.f32.mxu0 0.0
      %970 = vmatmul.mubr.f32.gmra.mrb[0].mxu0 %v196
      %v971 = vpop.f32.mrb[0].mxu0
      %v972 = vadd.f32 0.0, %v971
      %v973 = vpop.f32.mrb[0].mxu0
      %974 = vmatprep.mubr.f32.mxu0 0.0
      %975 = vmatmul.mubr.f32.gmra.mrb[0].mxu0 %v199
      %v976 = vpop.f32.mrb[0].mxu0
      %v977 = vadd.f32 0.0, %v976
      %v978 = vpop.f32.mrb[0].mxu0
      %979 = vmatprep.mubr.f32.mxu0 0.0
      %980 = vmatmul.mubr.f32.gmra.mrb[0].mxu0 %v202
      %v981 = vpop.f32.mrb[0].mxu0
      %v982 = vadd.f32 0.0, %v981
      %v983 = vpop.f32.mrb[0].mxu0
      %984 = vdwg.mxu0
      %985 = vmatprep.subr.mxu0 0.0
      %986 = vmatpush1.msra.mxu0 %v53
      %987 = vmatprep.subr.mxu0 0.0
      %988 = vmatpush1.msra.mxu0 %v54
      %989 = vmatprep.subr.mxu0 0.0
      %990 = vmatpush1.msra.mxu0 %v55
      %991 = vmatprep.subr.mxu0 0.0
      %992 = vmatpush1.msra.mxu0 %v56
      %993 = vmatprep.subr.mxu0 0.0
      %994 = vmatpush1.msra.mxu0 %v57
      %995 = vmatprep.subr.mxu0 0.0
      %996 = vmatpush1.msra.mxu0 %v58
      %997 = vmatprep.subr.mxu0 0.0
      %998 = vmatpush1.msra.mxu0 %v59
      %999 = vmatprep.subr.mxu0 0.0
      %1000 = vmatpush1.msra.mxu0 %v60
      %1001 = vmatprep.subr.mxu0 0.0
      %1002 = vmatpush1.msra.mxu0 %v61
      %1003 = vmatprep.subr.mxu0 0.0
      %1004 = vmatpush1.msra.mxu0 %v62
      %1005 = vmatprep.subr.mxu0 0.0
      %1006 = vmatpush1.msra.mxu0 %v63
      %1007 = vmatprep.subr.mxu0 0.0
      %1008 = vmatpush1.msra.mxu0 %v64
      %1009 = vmatprep.subr.mxu0 0.0
      %1010 = vmatpush1.msra.mxu0 %v65
      %1011 = vmatprep.subr.mxu0 0.0
      %1012 = vmatpush1.msra.mxu0 %v66
      %1013 = vmatprep.subr.mxu0 0.0
      %1014 = vmatpush1.msra.mxu0 %v67
      %1015 = vmatprep.subr.mxu0 0.0
      %1016 = vmatpush1.msra.mxu0 %v68
      %1017 = vmatprep.subr.mxu0 0.0
      %1018 = vmatpush1.msra.mxu0 0.0
      %1019 = vmatprep.subr.mxu0 0.0
      %1020 = vmatpush1.msra.mxu0 0.0
      %1021 = vmatprep.subr.mxu0 0.0
      %1022 = vmatpush1.msra.mxu0 0.0
      %1023 = vmatprep.subr.mxu0 0.0
      %1024 = vmatpush1.msra.mxu0 0.0
      %1025 = vmatprep.subr.mxu0 0.0
      %1026 = vmatpush1.msra.mxu0 0.0
      %1027 = vmatprep.subr.mxu0 0.0
      %1028 = vmatpush1.msra.mxu0 0.0
      %1029 = vmatprep.subr.mxu0 0.0
      %1030 = vmatpush1.msra.mxu0 0.0
      %1031 = vmatprep.subr.mxu0 0.0
      %1032 = vmatpush1.msra.mxu0 0.0
      %1033 = vmatprep.subr.mxu0 0.0
      %1034 = vmatpush1.msra.mxu0 0.0
      %1035 = vmatprep.subr.mxu0 0.0
      %1036 = vmatpush1.msra.mxu0 0.0
      %1037 = vmatprep.subr.mxu0 0.0
      %1038 = vmatpush1.msra.mxu0 0.0
      %1039 = vmatprep.subr.mxu0 0.0
      %1040 = vmatpush1.msra.mxu0 0.0
      %1041 = vmatprep.subr.mxu0 0.0
      %1042 = vmatpush1.msra.mxu0 0.0
      %1043 = vmatprep.subr.mxu0 0.0
      %1044 = vmatpush1.msra.mxu0 0.0
      %1045 = vmatprep.subr.mxu0 0.0
      %1046 = vmatpush1.msra.mxu0 0.0
      %1047 = vmatprep.subr.mxu0 0.0
      %1048 = vmatpush1.msra.mxu0 0.0
      %1049 = vmatprep.mubr.f32.mxu0 0.0
      %1050 = vmatmul.mubr.f32.gmra.mrb[0].mxu0 %v967
      %v1051 = vpop.f32.mrb[0].mxu0
      %v1052 = vadd.f32 %v156, %v1051
      %v1053 = vpop.f32.mrb[0].mxu0
      %1054 = vmatprep.mubr.f32.mxu0 0.0
      %1055 = vmatmul.mubr.f32.gmra.mrb[0].mxu0 %v972
      %v1056 = vpop.f32.mrb[0].mxu0
      %v1057 = vadd.f32 %v161, %v1056
      %v1058 = vpop.f32.mrb[0].mxu0
      %1059 = vmatprep.mubr.f32.mxu0 0.0
      %1060 = vmatmul.mubr.f32.gmra.mrb[0].mxu0 %v977
      %v1061 = vpop.f32.mrb[0].mxu0
      %v1062 = vadd.f32 %v166, %v1061
      %v1063 = vpop.f32.mrb[0].mxu0
      %1064 = vmatprep.mubr.f32.mxu0 0.0
      %1065 = vmatmul.mubr.f32.gmra.mrb[0].mxu0 %v982
      %v1066 = vpop.f32.mrb[0].mxu0
      %v1067 = vadd.f32 %v171, %v1066
      %v1068 = vpop.f32.mrb[0].mxu0
      %1069 = vdwg.mxu0
      %v1070 = vmax.f32 %v1052, 0.0
      %v1071 = vmax.f32 %v1057, 0.0
      %v1072 = vmax.f32 %v1062, 0.0
      %v1073 = vmax.f32 %v1067, 0.0
      %1074 = vmatprep.subr.mxu0 0.0
      %1075 = vmatpush1.msra.mxu0 %v1070
      %1076 = vmatprep.subr.mxu0 0.0
      %1077 = vmatpush1.msra.mxu0 %v1071
      %1078 = vmatprep.subr.mxu0 0.0
      %1079 = vmatpush1.msra.mxu0 %v1072
      %1080 = vmatprep.subr.mxu0 0.0
      %1081 = vmatpush1.msra.mxu0 %v1073
      %1082 = vmatprep.subr.mxu0 0.0
      %1083 = vmatpush1.msra.mxu0 0.0
      %1084 = vmatprep.subr.mxu0 0.0
      %1085 = vmatpush1.msra.mxu0 0.0
      %1086 = vmatprep.subr.mxu0 0.0
      %1087 = vmatpush1.msra.mxu0 0.0
      %1088 = vmatprep.subr.mxu0 0.0
      %1089 = vmatpush1.msra.mxu0 0.0
      %1090 = vmatprep.subr.mxu0 0.0
      %1091 = vmatpush1.msra.mxu0 0.0
      %1092 = vmatprep.subr.mxu0 0.0
      %1093 = vmatpush1.msra.mxu0 0.0
      %1094 = vmatprep.subr.mxu0 0.0
      %1095 = vmatpush1.msra.mxu0 0.0
      %1096 = vmatprep.subr.mxu0 0.0
      %1097 = vmatpush1.msra.mxu0 0.0
      %1098 = vmatprep.subr.mxu0 0.0
      %1099 = vmatpush1.msra.mxu0 0.0
      %1100 = vmatprep.subr.mxu0 0.0
      %1101 = vmatpush1.msra.mxu0 0.0
      %1102 = vmatprep.subr.mxu0 0.0
      %1103 = vmatpush1.msra.mxu0 0.0
      %1104 = vmatprep.subr.mxu0 0.0
      %1105 = vmatpush1.msra.mxu0 0.0
      %1106 = vmatprep.subr.mxu0 0.0
      %1107 = vmatpush1.msra.mxu0 0.0
      %1108 = vmatprep.subr.mxu0 0.0
      %1109 = vmatpush1.msra.mxu0 0.0
      %1110 = vmatprep.subr.mxu0 0.0
      %1111 = vmatpush1.msra.mxu0 0.0
      %1112 = vmatprep.subr.mxu0 0.0
      %1113 = vmatpush1.msra.mxu0 0.0
      %1114 = vmatprep.subr.mxu0 0.0
      %1115 = vmatpush1.msra.mxu0 0.0
      %1116 = vmatprep.subr.mxu0 0.0
      %1117 = vmatpush1.msra.mxu0 0.0
      %1118 = vmatprep.subr.mxu0 0.0
      %1119 = vmatpush1.msra.mxu0 0.0
      %1120 = vmatprep.subr.mxu0 0.0
      %1121 = vmatpush1.msra.mxu0 0.0
      %1122 = vmatprep.subr.mxu0 0.0
      %1123 = vmatpush1.msra.mxu0 0.0
      %1124 = vmatprep.subr.mxu0 0.0
      %1125 = vmatpush1.msra.mxu0 0.0
      %1126 = vmatprep.subr.mxu0 0.0
      %1127 = vmatpush1.msra.mxu0 0.0
      %1128 = vmatprep.subr.mxu0 0.0
      %1129 = vmatpush1.msra.mxu0 0.0
      %1130 = vmatprep.subr.mxu0 0.0
      %1131 = vmatpush1.msra.mxu0 0.0
      %1132 = vmatprep.subr.mxu0 0.0
      %1133 = vmatpush1.msra.mxu0 0.0
      %1134 = vmatprep.subr.mxu0 0.0
      %1135 = vmatpush1.msra.mxu0 0.0
      %1136 = vmatprep.subr.mxu0 0.0
      %1137 = vmatpush1.msra.mxu0 0.0
      %1138 = vmatprep.mubr.f32.mxu0 0.0
      %1139 = vmatmul.mubr.f32.gmra.mrb[0].mxu0 %v193
      %v1140 = vpop.f32.mrb[0].mxu0
      %v1141 = vadd.f32 0.0, %v1140
      %v1142 = vpop.f32.mrb[0].mxu0
      %1143 = vmatprep.mubr.f32.mxu0 0.0
      %1144 = vmatmul.mubr.f32.gmra.mrb[0].mxu0 %v196
      %v1145 = vpop.f32.mrb[0].mxu0
      %v1146 = vadd.f32 0.0, %v1145
      %v1147 = vpop.f32.mrb[0].mxu0
      %1148 = vmatprep.mubr.f32.mxu0 0.0
      %1149 = vmatmul.mubr.f32.gmra.mrb[0].mxu0 %v199
      %v1150 = vpop.f32.mrb[0].mxu0
      %v1151 = vadd.f32 0.0, %v1150
      %v1152 = vpop.f32.mrb[0].mxu0
      %1153 = vmatprep.mubr.f32.mxu0 0.0
      %1154 = vmatmul.mubr.f32.gmra.mrb[0].mxu0 %v202
      %v1155 = vpop.f32.mrb[0].mxu0
      %v1156 = vadd.f32 0.0, %v1155
      %v1157 = vpop.f32.mrb[0].mxu0
      %1158 = vdwg.mxu0
      %1159 = vmatprep.subr.mxu0 0.0
      %1160 = vmatpush1.msra.mxu0 %v53
      %1161 = vmatprep.subr.mxu0 0.0
      %1162 = vmatpush1.msra.mxu0 %v54
      %1163 = vmatprep.subr.mxu0 0.0
      %1164 = vmatpush1.msra.mxu0 %v55
      %1165 = vmatprep.subr.mxu0 0.0
      %1166 = vmatpush1.msra.mxu0 %v56
      %1167 = vmatprep.subr.mxu0 0.0
      %1168 = vmatpush1.msra.mxu0 %v57
      %1169 = vmatprep.subr.mxu0 0.0
      %1170 = vmatpush1.msra.mxu0 %v58
      %1171 = vmatprep.subr.mxu0 0.0
      %1172 = vmatpush1.msra.mxu0 %v59
      %1173 = vmatprep.subr.mxu0 0.0
      %1174 = vmatpush1.msra.mxu0 %v60
      %1175 = vmatprep.subr.mxu0 0.0
      %1176 = vmatpush1.msra.mxu0 %v61
      %1177 = vmatprep.subr.mxu0 0.0
      %1178 = vmatpush1.msra.mxu0 %v62
      %1179 = vmatprep.subr.mxu0 0.0
      %1180 = vmatpush1.msra.mxu0 %v63
      %1181 = vmatprep.subr.mxu0 0.0
      %1182 = vmatpush1.msra.mxu0 %v64
      %1183 = vmatprep.subr.mxu0 0.0
      %1184 = vmatpush1.msra.mxu0 %v65
      %1185 = vmatprep.subr.mxu0 0.0
      %1186 = vmatpush1.msra.mxu0 %v66
      %1187 = vmatprep.subr.mxu0 0.0
      %1188 = vmatpush1.msra.mxu0 %v67
      %1189 = vmatprep.subr.mxu0 0.0
      %1190 = vmatpush1.msra.mxu0 %v68
      %1191 = vmatprep.subr.mxu0 0.0
      %1192 = vmatpush1.msra.mxu0 0.0
      %1193 = vmatprep.subr.mxu0 0.0
      %1194 = vmatpush1.msra.mxu0 0.0
      %1195 = vmatprep.subr.mxu0 0.0
      %1196 = vmatpush1.msra.mxu0 0.0
      %1197 = vmatprep.subr.mxu0 0.0
      %1198 = vmatpush1.msra.mxu0 0.0
      %1199 = vmatprep.subr.mxu0 0.0
      %1200 = vmatpush1.msra.mxu0 0.0
      %1201 = vmatprep.subr.mxu0 0.0
      %1202 = vmatpush1.msra.mxu0 0.0
      %1203 = vmatprep.subr.mxu0 0.0
      %1204 = vmatpush1.msra.mxu0 0.0
      %1205 = vmatprep.subr.mxu0 0.0
      %1206 = vmatpush1.msra.mxu0 0.0
      %1207 = vmatprep.subr.mxu0 0.0
      %1208 = vmatpush1.msra.mxu0 0.0
      %1209 = vmatprep.subr.mxu0 0.0
      %1210 = vmatpush1.msra.mxu0 0.0
      %1211 = vmatprep.subr.mxu0 0.0
      %1212 = vmatpush1.msra.mxu0 0.0
      %1213 = vmatprep.subr.mxu0 0.0
      %1214 = vmatpush1.msra.mxu0 0.0
      %1215 = vmatprep.subr.mxu0 0.0
      %1216 = vmatpush1.msra.mxu0 0.0
      %1217 = vmatprep.subr.mxu0 0.0
      %1218 = vmatpush1.msra.mxu0 0.0
      %1219 = vmatprep.subr.mxu0 0.0
      %1220 = vmatpush1.msra.mxu0 0.0
      %1221 = vmatprep.subr.mxu0 0.0
      %1222 = vmatpush1.msra.mxu0 0.0
      %1223 = vmatprep.mubr.f32.mxu0 0.0
      %1224 = vmatmul.mubr.f32.gmra.mrb[0].mxu0 %v1141
      %v1225 = vpop.f32.mrb[0].mxu0
      %v1226 = vadd.f32 %v156, %v1225
      %v1227 = vpop.f32.mrb[0].mxu0
      %1228 = vmatprep.mubr.f32.mxu0 0.0
      %1229 = vmatmul.mubr.f32.gmra.mrb[0].mxu0 %v1146
      %v1230 = vpop.f32.mrb[0].mxu0
      %v1231 = vadd.f32 %v161, %v1230
      %v1232 = vpop.f32.mrb[0].mxu0
      %1233 = vmatprep.mubr.f32.mxu0 0.0
      %1234 = vmatmul.mubr.f32.gmra.mrb[0].mxu0 %v1151
      %v1235 = vpop.f32.mrb[0].mxu0
      %v1236 = vadd.f32 %v166, %v1235
      %v1237 = vpop.f32.mrb[0].mxu0
      %1238 = vmatprep.mubr.f32.mxu0 0.0
      %1239 = vmatmul.mubr.f32.gmra.mrb[0].mxu0 %v1156
      %v1240 = vpop.f32.mrb[0].mxu0
      %v1241 = vadd.f32 %v171, %v1240
      %v1242 = vpop.f32.mrb[0].mxu0
      %1243 = vdwg.mxu0
      %v1244 = vmax.f32 %v1226, 0.0
      %v1245 = vmax.f32 %v1231, 0.0
      %v1246 = vmax.f32 %v1236, 0.0
      %v1247 = vmax.f32 %v1241, 0.0
      %1248 = vmatprep.subr.mxu0 0.0
      %1249 = vmatpush1.msra.mxu0 %v1244
      %1250 = vmatprep.subr.mxu0 0.0
      %1251 = vmatpush1.msra.mxu0 %v1245
      %1252 = vmatprep.subr.mxu0 0.0
      %1253 = vmatpush1.msra.mxu0 %v1246
      %1254 = vmatprep.subr.mxu0 0.0
      %1255 = vmatpush1.msra.mxu0 %v1247
      %1256 = vmatprep.subr.mxu0 0.0
      %1257 = vmatpush1.msra.mxu0 0.0
      %1258 = vmatprep.subr.mxu0 0.0
      %1259 = vmatpush1.msra.mxu0 0.0
      %1260 = vmatprep.subr.mxu0 0.0
      %1261 = vmatpush1.msra.mxu0 0.0
      %1262 = vmatprep.subr.mxu0 0.0
      %1263 = vmatpush1.msra.mxu0 0.0
      %1264 = vmatprep.subr.mxu0 0.0
      %1265 = vmatpush1.msra.mxu0 0.0
      %1266 = vmatprep.subr.mxu0 0.0
      %1267 = vmatpush1.msra.mxu0 0.0
      %1268 = vmatprep.subr.mxu0 0.0
      %1269 = vmatpush1.msra.mxu0 0.0
      %1270 = vmatprep.subr.mxu0 0.0
      %1271 = vmatpush1.msra.mxu0 0.0
      %1272 = vmatprep.subr.mxu0 0.0
      %1273 = vmatpush1.msra.mxu0 0.0
      %1274 = vmatprep.subr.mxu0 0.0
      %1275 = vmatpush1.msra.mxu0 0.0
      %1276 = vmatprep.subr.mxu0 0.0
      %1277 = vmatpush1.msra.mxu0 0.0
      %1278 = vmatprep.subr.mxu0 0.0
      %1279 = vmatpush1.msra.mxu0 0.0
      %1280 = vmatprep.subr.mxu0 0.0
      %1281 = vmatpush1.msra.mxu0 0.0
      %1282 = vmatprep.subr.mxu0 0.0
      %1283 = vmatpush1.msra.mxu0 0.0
      %1284 = vmatprep.subr.mxu0 0.0
      %1285 = vmatpush1.msra.mxu0 0.0
      %1286 = vmatprep.subr.mxu0 0.0
      %1287 = vmatpush1.msra.mxu0 0.0
      %1288 = vmatprep.subr.mxu0 0.0
      %1289 = vmatpush1.msra.mxu0 0.0
      %1290 = vmatprep.subr.mxu0 0.0
      %1291 = vmatpush1.msra.mxu0 0.0
      %1292 = vmatprep.subr.mxu0 0.0
      %1293 = vmatpush1.msra.mxu0 0.0
      %1294 = vmatprep.subr.mxu0 0.0
      %1295 = vmatpush1.msra.mxu0 0.0
      %1296 = vmatprep.subr.mxu0 0.0
      %1297 = vmatpush1.msra.mxu0 0.0
      %1298 = vmatprep.subr.mxu0 0.0
      %1299 = vmatpush1.msra.mxu0 0.0
      %1300 = vmatprep.subr.mxu0 0.0
      %1301 = vmatpush1.msra.mxu0 0.0
      %1302 = vmatprep.subr.mxu0 0.0
      %1303 = vmatpush1.msra.mxu0 0.0
      %1304 = vmatprep.subr.mxu0 0.0
      %1305 = vmatpush1.msra.mxu0 0.0
      %1306 = vmatprep.subr.mxu0 0.0
      %1307 = vmatpush1.msra.mxu0 0.0
      %1308 = vmatprep.subr.mxu0 0.0
      %1309 = vmatpush1.msra.mxu0 0.0
      %1310 = vmatprep.subr.mxu0 0.0
      %1311 = vmatpush1.msra.mxu0 0.0
      %1312 = vmatprep.mubr.f32.mxu0 0.0
      %1313 = vmatmul.mubr.f32.gmra.mrb[0].mxu0 %v193
      %v1314 = vpop.f32.mrb[0].mxu0
      %v1315 = vadd.f32 0.0, %v1314
      %v1316 = vpop.f32.mrb[0].mxu0
      %1317 = vmatprep.mubr.f32.mxu0 0.0
      %1318 = vmatmul.mubr.f32.gmra.mrb[0].mxu0 %v196
      %v1319 = vpop.f32.mrb[0].mxu0
      %v1320 = vadd.f32 0.0, %v1319
      %v1321 = vpop.f32.mrb[0].mxu0
      %1322 = vmatprep.mubr.f32.mxu0 0.0
      %1323 = vmatmul.mubr.f32.gmra.mrb[0].mxu0 %v199
      %v1324 = vpop.f32.mrb[0].mxu0
      %v1325 = vadd.f32 0.0, %v1324
      %v1326 = vpop.f32.mrb[0].mxu0
      %1327 = vmatprep.mubr.f32.mxu0 0.0
      %1328 = vmatmul.mubr.f32.gmra.mrb[0].mxu0 %v202
      %v1329 = vpop.f32.mrb[0].mxu0
      %v1330 = vadd.f32 0.0, %v1329
      %v1331 = vpop.f32.mrb[0].mxu0
      %1332 = vdwg.mxu0
      %1333 = vmatprep.subr.mxu0 0.0
      %1334 = vmatpush1.msra.mxu0 %v53
      %1335 = vmatprep.subr.mxu0 0.0
      %1336 = vmatpush1.msra.mxu0 %v54
      %1337 = vmatprep.subr.mxu0 0.0
      %1338 = vmatpush1.msra.mxu0 %v55
      %1339 = vmatprep.subr.mxu0 0.0
      %1340 = vmatpush1.msra.mxu0 %v56
      %1341 = vmatprep.subr.mxu0 0.0
      %1342 = vmatpush1.msra.mxu0 %v57
      %1343 = vmatprep.subr.mxu0 0.0
      %1344 = vmatpush1.msra.mxu0 %v58
      %1345 = vmatprep.subr.mxu0 0.0
      %1346 = vmatpush1.msra.mxu0 %v59
      %1347 = vmatprep.subr.mxu0 0.0
      %1348 = vmatpush1.msra.mxu0 %v60
      %1349 = vmatprep.subr.mxu0 0.0
      %1350 = vmatpush1.msra.mxu0 %v61
      %1351 = vmatprep.subr.mxu0 0.0
      %1352 = vmatpush1.msra.mxu0 %v62
      %1353 = vmatprep.subr.mxu0 0.0
      %1354 = vmatpush1.msra.mxu0 %v63
      %1355 = vmatprep.subr.mxu0 0.0
      %1356 = vmatpush1.msra.mxu0 %v64
      %1357 = vmatprep.subr.mxu0 0.0
      %1358 = vmatpush1.msra.mxu0 %v65
      %1359 = vmatprep.subr.mxu0 0.0
      %1360 = vmatpush1.msra.mxu0 %v66
      %1361 = vmatprep.subr.mxu0 0.0
      %1362 = vmatpush1.msra.mxu0 %v67
      %1363 = vmatprep.subr.mxu0 0.0
      %1364 = vmatpush1.msra.mxu0 %v68
      %1365 = vmatprep.subr.mxu0 0.0
      %1366 = vmatpush1.msra.mxu0 0.0
      %1367 = vmatprep.subr.mxu0 0.0
      %1368 = vmatpush1.msra.mxu0 0.0
      %1369 = vmatprep.subr.mxu0 0.0
      %1370 = vmatpush1.msra.mxu0 0.0
      %1371 = vmatprep.subr.mxu0 0.0
      %1372 = vmatpush1.msra.mxu0 0.0
      %1373 = vmatprep.subr.mxu0 0.0
      %1374 = vmatpush1.msra.mxu0 0.0
      %1375 = vmatprep.subr.mxu0 0.0
      %1376 = vmatpush1.msra.mxu0 0.0
      %1377 = vmatprep.subr.mxu0 0.0
      %1378 = vmatpush1.msra.mxu0 0.0
      %1379 = vmatprep.subr.mxu0 0.0
      %1380 = vmatpush1.msra.mxu0 0.0
      %1381 = vmatprep.subr.mxu0 0.0
      %1382 = vmatpush1.msra.mxu0 0.0
      %1383 = vmatprep.subr.mxu0 0.0
      %1384 = vmatpush1.msra.mxu0 0.0
      %1385 = vmatprep.subr.mxu0 0.0
      %1386 = vmatpush1.msra.mxu0 0.0
      %1387 = vmatprep.subr.mxu0 0.0
      %1388 = vmatpush1.msra.mxu0 0.0
      %1389 = vmatprep.subr.mxu0 0.0
      %1390 = vmatpush1.msra.mxu0 0.0
      %1391 = vmatprep.subr.mxu0 0.0
      %1392 = vmatpush1.msra.mxu0 0.0
      %1393 = vmatprep.subr.mxu0 0.0
      %1394 = vmatpush1.msra.mxu0 0.0
      %1395 = vmatprep.subr.mxu0 0.0
      %1396 = vmatpush1.msra.mxu0 0.0
      %1397 = vmatprep.mubr.f32.mxu0 0.0
      %1398 = vmatmul.mubr.f32.gmra.mrb[0].mxu0 %v1315
      %v1399 = vpop.f32.mrb[0].mxu0
      %v1400 = vadd.f32 %v156, %v1399
      %v1401 = vpop.f32.mrb[0].mxu0
      %1402 = vmatprep.mubr.f32.mxu0 0.0
      %1403 = vmatmul.mubr.f32.gmra.mrb[0].mxu0 %v1320
      %v1404 = vpop.f32.mrb[0].mxu0
      %v1405 = vadd.f32 %v161, %v1404
      %v1406 = vpop.f32.mrb[0].mxu0
      %1407 = vmatprep.mubr.f32.mxu0 0.0
      %1408 = vmatmul.mubr.f32.gmra.mrb[0].mxu0 %v1325
      %v1409 = vpop.f32.mrb[0].mxu0
      %v1410 = vadd.f32 %v166, %v1409
      %v1411 = vpop.f32.mrb[0].mxu0
      %1412 = vmatprep.mubr.f32.mxu0 0.0
      %1413 = vmatmul.mubr.f32.gmra.mrb[0].mxu0 %v1330
      %v1414 = vpop.f32.mrb[0].mxu0
      %v1415 = vadd.f32 %v171, %v1414
      %v1416 = vpop.f32.mrb[0].mxu0
      %1417 = vdwg.mxu0
      %v1418 = vmax.f32 %v1400, 0.0
      %v1419 = vmax.f32 %v1405, 0.0
      %v1420 = vmax.f32 %v1410, 0.0
      %v1421 = vmax.f32 %v1415, 0.0
      %1422 = vmatprep.subr.mxu0 0.0
      %1423 = vmatpush1.msra.mxu0 %v1418
      %1424 = vmatprep.subr.mxu0 0.0
      %1425 = vmatpush1.msra.mxu0 %v1419
      %1426 = vmatprep.subr.mxu0 0.0
      %1427 = vmatpush1.msra.mxu0 %v1420
      %1428 = vmatprep.subr.mxu0 0.0
      %1429 = vmatpush1.msra.mxu0 %v1421
      %1430 = vmatprep.subr.mxu0 0.0
      %1431 = vmatpush1.msra.mxu0 0.0
      %1432 = vmatprep.subr.mxu0 0.0
      %1433 = vmatpush1.msra.mxu0 0.0
      %1434 = vmatprep.subr.mxu0 0.0
      %1435 = vmatpush1.msra.mxu0 0.0
      %1436 = vmatprep.subr.mxu0 0.0
      %1437 = vmatpush1.msra.mxu0 0.0
      %1438 = vmatprep.subr.mxu0 0.0
      %1439 = vmatpush1.msra.mxu0 0.0
      %1440 = vmatprep.subr.mxu0 0.0
      %1441 = vmatpush1.msra.mxu0 0.0
      %1442 = vmatprep.subr.mxu0 0.0
      %1443 = vmatpush1.msra.mxu0 0.0
      %1444 = vmatprep.subr.mxu0 0.0
      %1445 = vmatpush1.msra.mxu0 0.0
      %1446 = vmatprep.subr.mxu0 0.0
      %1447 = vmatpush1.msra.mxu0 0.0
      %1448 = vmatprep.subr.mxu0 0.0
      %1449 = vmatpush1.msra.mxu0 0.0
      %1450 = vmatprep.subr.mxu0 0.0
      %1451 = vmatpush1.msra.mxu0 0.0
      %1452 = vmatprep.subr.mxu0 0.0
      %1453 = vmatpush1.msra.mxu0 0.0
      %1454 = vmatprep.subr.mxu0 0.0
      %1455 = vmatpush1.msra.mxu0 0.0
      %1456 = vmatprep.subr.mxu0 0.0
      %1457 = vmatpush1.msra.mxu0 0.0
      %1458 = vmatprep.subr.mxu0 0.0
      %1459 = vmatpush1.msra.mxu0 0.0
      %1460 = vmatprep.subr.mxu0 0.0
      %1461 = vmatpush1.msra.mxu0 0.0
      %1462 = vmatprep.subr.mxu0 0.0
      %1463 = vmatpush1.msra.mxu0 0.0
      %1464 = vmatprep.subr.mxu0 0.0
      %1465 = vmatpush1.msra.mxu0 0.0
      %1466 = vmatprep.subr.mxu0 0.0
      %1467 = vmatpush1.msra.mxu0 0.0
      %1468 = vmatprep.subr.mxu0 0.0
      %1469 = vmatpush1.msra.mxu0 0.0
      %1470 = vmatprep.subr.mxu0 0.0
      %1471 = vmatpush1.msra.mxu0 0.0
      %1472 = vmatprep.subr.mxu0 0.0
      %1473 = vmatpush1.msra.mxu0 0.0
      %1474 = vmatprep.subr.mxu0 0.0
      %1475 = vmatpush1.msra.mxu0 0.0
      %1476 = vmatprep.subr.mxu0 0.0
      %1477 = vmatpush1.msra.mxu0 0.0
      %1478 = vmatprep.subr.mxu0 0.0
      %1479 = vmatpush1.msra.mxu0 0.0
      %1480 = vmatprep.subr.mxu0 0.0
      %1481 = vmatpush1.msra.mxu0 0.0
      %1482 = vmatprep.subr.mxu0 0.0
      %1483 = vmatpush1.msra.mxu0 0.0
      %1484 = vmatprep.subr.mxu0 0.0
      %1485 = vmatpush1.msra.mxu0 0.0
      %1486 = vmatprep.mubr.f32.mxu0 0.0
      %1487 = vmatmul.mubr.f32.gmra.mrb[0].mxu0 %v193
      %v1488 = vpop.f32.mrb[0].mxu0
      %v1489 = vadd.f32 0.0, %v1488
      %v1490 = vpop.f32.mrb[0].mxu0
      %1491 = vmatprep.mubr.f32.mxu0 0.0
      %1492 = vmatmul.mubr.f32.gmra.mrb[0].mxu0 %v196
      %v1493 = vpop.f32.mrb[0].mxu0
      %v1494 = vadd.f32 0.0, %v1493
      %v1495 = vpop.f32.mrb[0].mxu0
      %1496 = vmatprep.mubr.f32.mxu0 0.0
      %1497 = vmatmul.mubr.f32.gmra.mrb[0].mxu0 %v199
      %v1498 = vpop.f32.mrb[0].mxu0
      %v1499 = vadd.f32 0.0, %v1498
      %v1500 = vpop.f32.mrb[0].mxu0
      %1501 = vmatprep.mubr.f32.mxu0 0.0
      %1502 = vmatmul.mubr.f32.gmra.mrb[0].mxu0 %v202
      %v1503 = vpop.f32.mrb[0].mxu0
      %v1504 = vadd.f32 0.0, %v1503
      %v1505 = vpop.f32.mrb[0].mxu0
      %1506 = vdwg.mxu0
      %1507 = vmatprep.subr.mxu0 0.0
      %1508 = vmatpush1.msra.mxu0 %v53
      %1509 = vmatprep.subr.mxu0 0.0
      %1510 = vmatpush1.msra.mxu0 %v54
      %1511 = vmatprep.subr.mxu0 0.0
      %1512 = vmatpush1.msra.mxu0 %v55
      %1513 = vmatprep.subr.mxu0 0.0
      %1514 = vmatpush1.msra.mxu0 %v56
      %1515 = vmatprep.subr.mxu0 0.0
      %1516 = vmatpush1.msra.mxu0 %v57
      %1517 = vmatprep.subr.mxu0 0.0
      %1518 = vmatpush1.msra.mxu0 %v58
      %1519 = vmatprep.subr.mxu0 0.0
      %1520 = vmatpush1.msra.mxu0 %v59
      %1521 = vmatprep.subr.mxu0 0.0
      %1522 = vmatpush1.msra.mxu0 %v60
      %1523 = vmatprep.subr.mxu0 0.0
      %1524 = vmatpush1.msra.mxu0 %v61
      %1525 = vmatprep.subr.mxu0 0.0
      %1526 = vmatpush1.msra.mxu0 %v62
      %1527 = vmatprep.subr.mxu0 0.0
      %1528 = vmatpush1.msra.mxu0 %v63
      %1529 = vmatprep.subr.mxu0 0.0
      %1530 = vmatpush1.msra.mxu0 %v64
      %1531 = vmatprep.subr.mxu0 0.0
      %1532 = vmatpush1.msra.mxu0 %v65
      %1533 = vmatprep.subr.mxu0 0.0
      %1534 = vmatpush1.msra.mxu0 %v66
      %1535 = vmatprep.subr.mxu0 0.0
      %1536 = vmatpush1.msra.mxu0 %v67
      %1537 = vmatprep.subr.mxu0 0.0
      %1538 = vmatpush1.msra.mxu0 %v68
      %1539 = vmatprep.subr.mxu0 0.0
      %1540 = vmatpush1.msra.mxu0 0.0
      %1541 = vmatprep.subr.mxu0 0.0
      %1542 = vmatpush1.msra.mxu0 0.0
      %1543 = vmatprep.subr.mxu0 0.0
      %1544 = vmatpush1.msra.mxu0 0.0
      %1545 = vmatprep.subr.mxu0 0.0
      %1546 = vmatpush1.msra.mxu0 0.0
      %1547 = vmatprep.subr.mxu0 0.0
      %1548 = vmatpush1.msra.mxu0 0.0
      %1549 = vmatprep.subr.mxu0 0.0
      %1550 = vmatpush1.msra.mxu0 0.0
      %1551 = vmatprep.subr.mxu0 0.0
      %1552 = vmatpush1.msra.mxu0 0.0
      %1553 = vmatprep.subr.mxu0 0.0
      %1554 = vmatpush1.msra.mxu0 0.0
      %1555 = vmatprep.subr.mxu0 0.0
      %1556 = vmatpush1.msra.mxu0 0.0
      %1557 = vmatprep.subr.mxu0 0.0
      %1558 = vmatpush1.msra.mxu0 0.0
      %1559 = vmatprep.subr.mxu0 0.0
      %1560 = vmatpush1.msra.mxu0 0.0
      %1561 = vmatprep.subr.mxu0 0.0
      %1562 = vmatpush1.msra.mxu0 0.0
      %1563 = vmatprep.subr.mxu0 0.0
      %1564 = vmatpush1.msra.mxu0 0.0
      %1565 = vmatprep.subr.mxu0 0.0
      %1566 = vmatpush1.msra.mxu0 0.0
      %1567 = vmatprep.subr.mxu0 0.0
      %1568 = vmatpush1.msra.mxu0 0.0
      %1569 = vmatprep.subr.mxu0 0.0
      %1570 = vmatpush1.msra.mxu0 0.0
      %1571 = vmatprep.mubr.f32.mxu0 0.0
      %1572 = vmatmul.mubr.f32.gmra.mrb[0].mxu0 %v1489
      %v1573 = vpop.f32.mrb[0].mxu0
      %v1574 = vadd.f32 %v156, %v1573
      %v1575 = vpop.f32.mrb[0].mxu0
      %1576 = vmatprep.mubr.f32.mxu0 0.0
      %1577 = vmatmul.mubr.f32.gmra.mrb[0].mxu0 %v1494
      %v1578 = vpop.f32.mrb[0].mxu0
      %v1579 = vadd.f32 %v161, %v1578
      %v1580 = vpop.f32.mrb[0].mxu0
      %1581 = vmatprep.mubr.f32.mxu0 0.0
      %1582 = vmatmul.mubr.f32.gmra.mrb[0].mxu0 %v1499
      %v1583 = vpop.f32.mrb[0].mxu0
      %v1584 = vadd.f32 %v166, %v1583
      %v1585 = vpop.f32.mrb[0].mxu0
      %1586 = vmatprep.mubr.f32.mxu0 0.0
      %1587 = vmatmul.mubr.f32.gmra.mrb[0].mxu0 %v1504
      %v1588 = vpop.f32.mrb[0].mxu0
      %v1589 = vadd.f32 %v171, %v1588
      %v1590 = vpop.f32.mrb[0].mxu0
      %1591 = vdwg.mxu0
      %v1592 = vmax.f32 %v1574, 0.0
      %v1593 = vmax.f32 %v1579, 0.0
      %v1594 = vmax.f32 %v1584, 0.0
      %v1595 = vmax.f32 %v1589, 0.0
      %1596 = vmatprep.subr.mxu0 0.0
      %1597 = vmatpush1.msra.mxu0 %v1592
      %1598 = vmatprep.subr.mxu0 0.0
      %1599 = vmatpush1.msra.mxu0 %v1593
      %1600 = vmatprep.subr.mxu0 0.0
      %1601 = vmatpush1.msra.mxu0 %v1594
      %1602 = vmatprep.subr.mxu0 0.0
      %1603 = vmatpush1.msra.mxu0 %v1595
      %1604 = vmatprep.subr.mxu0 0.0
      %1605 = vmatpush1.msra.mxu0 0.0
      %1606 = vmatprep.subr.mxu0 0.0
      %1607 = vmatpush1.msra.mxu0 0.0
      %1608 = vmatprep.subr.mxu0 0.0
      %1609 = vmatpush1.msra.mxu0 0.0
      %1610 = vmatprep.subr.mxu0 0.0
      %1611 = vmatpush1.msra.mxu0 0.0
      %1612 = vmatprep.subr.mxu0 0.0
      %1613 = vmatpush1.msra.mxu0 0.0
      %1614 = vmatprep.subr.mxu0 0.0
      %1615 = vmatpush1.msra.mxu0 0.0
      %1616 = vmatprep.subr.mxu0 0.0
      %1617 = vmatpush1.msra.mxu0 0.0
      %1618 = vmatprep.subr.mxu0 0.0
      %1619 = vmatpush1.msra.mxu0 0.0
      %1620 = vmatprep.subr.mxu0 0.0
      %1621 = vmatpush1.msra.mxu0 0.0
      %1622 = vmatprep.subr.mxu0 0.0
      %1623 = vmatpush1.msra.mxu0 0.0
      %1624 = vmatprep.subr.mxu0 0.0
      %1625 = vmatpush1.msra.mxu0 0.0
      %1626 = vmatprep.subr.mxu0 0.0
      %1627 = vmatpush1.msra.mxu0 0.0
      %1628 = vmatprep.subr.mxu0 0.0
      %1629 = vmatpush1.msra.mxu0 0.0
      %1630 = vmatprep.subr.mxu0 0.0
      %1631 = vmatpush1.msra.mxu0 0.0
      %1632 = vmatprep.subr.mxu0 0.0
      %1633 = vmatpush1.msra.mxu0 0.0
      %1634 = vmatprep.subr.mxu0 0.0
      %1635 = vmatpush1.msra.mxu0 0.0
      %1636 = vmatprep.subr.mxu0 0.0
      %1637 = vmatpush1.msra.mxu0 0.0
      %1638 = vmatprep.subr.mxu0 0.0
      %1639 = vmatpush1.msra.mxu0 0.0
      %1640 = vmatprep.subr.mxu0 0.0
      %1641 = vmatpush1.msra.mxu0 0.0
      %1642 = vmatprep.subr.mxu0 0.0
      %1643 = vmatpush1.msra.mxu0 0.0
      %1644 = vmatprep.subr.mxu0 0.0
      %1645 = vmatpush1.msra.mxu0 0.0
      %1646 = vmatprep.subr.mxu0 0.0
      %1647 = vmatpush1.msra.mxu0 0.0
      %1648 = vmatprep.subr.mxu0 0.0
      %1649 = vmatpush1.msra.mxu0 0.0
      %1650 = vmatprep.subr.mxu0 0.0
      %1651 = vmatpush1.msra.mxu0 0.0
      %1652 = vmatprep.subr.mxu0 0.0
      %1653 = vmatpush1.msra.mxu0 0.0
      %1654 = vmatprep.subr.mxu0 0.0
      %1655 = vmatpush1.msra.mxu0 0.0
      %1656 = vmatprep.subr.mxu0 0.0
      %1657 = vmatpush1.msra.mxu0 0.0
      %1658 = vmatprep.subr.mxu0 0.0
      %1659 = vmatpush1.msra.mxu0 0.0
      %1660 = vmatprep.mubr.f32.mxu0 0.0
      %1661 = vmatmul.mubr.f32.gmra.mrb[0].mxu0 %v193
      %v1662 = vpop.f32.mrb[0].mxu0
      %v1663 = vadd.f32 0.0, %v1662
      %v1664 = vpop.f32.mrb[0].mxu0
      %1665 = vmatprep.mubr.f32.mxu0 0.0
      %1666 = vmatmul.mubr.f32.gmra.mrb[0].mxu0 %v196
      %v1667 = vpop.f32.mrb[0].mxu0
      %v1668 = vadd.f32 0.0, %v1667
      %v1669 = vpop.f32.mrb[0].mxu0
      %1670 = vmatprep.mubr.f32.mxu0 0.0
      %1671 = vmatmul.mubr.f32.gmra.mrb[0].mxu0 %v199
      %v1672 = vpop.f32.mrb[0].mxu0
      %v1673 = vadd.f32 0.0, %v1672
      %v1674 = vpop.f32.mrb[0].mxu0
      %1675 = vmatprep.mubr.f32.mxu0 0.0
      %1676 = vmatmul.mubr.f32.gmra.mrb[0].mxu0 %v202
      %v1677 = vpop.f32.mrb[0].mxu0
      %v1678 = vadd.f32 0.0, %v1677
      %v1679 = vpop.f32.mrb[0].mxu0
      %1680 = vdwg.mxu0
      %1681 = vmatprep.subr.mxu0 0.0
      %1682 = vmatpush1.msra.mxu0 %v53
      %1683 = vmatprep.subr.mxu0 0.0
      %1684 = vmatpush1.msra.mxu0 %v54
      %1685 = vmatprep.subr.mxu0 0.0
      %1686 = vmatpush1.msra.mxu0 %v55
      %1687 = vmatprep.subr.mxu0 0.0
      %1688 = vmatpush1.msra.mxu0 %v56
      %1689 = vmatprep.subr.mxu0 0.0
      %1690 = vmatpush1.msra.mxu0 %v57
      %1691 = vmatprep.subr.mxu0 0.0
      %1692 = vmatpush1.msra.mxu0 %v58
      %1693 = vmatprep.subr.mxu0 0.0
      %1694 = vmatpush1.msra.mxu0 %v59
      %1695 = vmatprep.subr.mxu0 0.0
      %1696 = vmatpush1.msra.mxu0 %v60
      %1697 = vmatprep.subr.mxu0 0.0
      %1698 = vmatpush1.msra.mxu0 %v61
      %1699 = vmatprep.subr.mxu0 0.0
      %1700 = vmatpush1.msra.mxu0 %v62
      %1701 = vmatprep.subr.mxu0 0.0
      %1702 = vmatpush1.msra.mxu0 %v63
      %1703 = vmatprep.subr.mxu0 0.0
      %1704 = vmatpush1.msra.mxu0 %v64
      %1705 = vmatprep.subr.mxu0 0.0
      %1706 = vmatpush1.msra.mxu0 %v65
      %1707 = vmatprep.subr.mxu0 0.0
      %1708 = vmatpush1.msra.mxu0 %v66
      %1709 = vmatprep.subr.mxu0 0.0
      %1710 = vmatpush1.msra.mxu0 %v67
      %1711 = vmatprep.subr.mxu0 0.0
      %1712 = vmatpush1.msra.mxu0 %v68
      %1713 = vmatprep.subr.mxu0 0.0
      %1714 = vmatpush1.msra.mxu0 0.0
      %1715 = vmatprep.subr.mxu0 0.0
      %1716 = vmatpush1.msra.mxu0 0.0
      %1717 = vmatprep.subr.mxu0 0.0
      %1718 = vmatpush1.msra.mxu0 0.0
      %1719 = vmatprep.subr.mxu0 0.0
      %1720 = vmatpush1.msra.mxu0 0.0
      %1721 = vmatprep.subr.mxu0 0.0
      %1722 = vmatpush1.msra.mxu0 0.0
      %1723 = vmatprep.subr.mxu0 0.0
      %1724 = vmatpush1.msra.mxu0 0.0
      %1725 = vmatprep.subr.mxu0 0.0
      %1726 = vmatpush1.msra.mxu0 0.0
      %1727 = vmatprep.subr.mxu0 0.0
      %1728 = vmatpush1.msra.mxu0 0.0
      %1729 = vmatprep.subr.mxu0 0.0
      %1730 = vmatpush1.msra.mxu0 0.0
      %1731 = vmatprep.subr.mxu0 0.0
      %1732 = vmatpush1.msra.mxu0 0.0
      %1733 = vmatprep.subr.mxu0 0.0
      %1734 = vmatpush1.msra.mxu0 0.0
      %1735 = vmatprep.subr.mxu0 0.0
      %1736 = vmatpush1.msra.mxu0 0.0
      %1737 = vmatprep.subr.mxu0 0.0
      %1738 = vmatpush1.msra.mxu0 0.0
      %1739 = vmatprep.subr.mxu0 0.0
      %1740 = vmatpush1.msra.mxu0 0.0
      %1741 = vmatprep.subr.mxu0 0.0
      %1742 = vmatpush1.msra.mxu0 0.0
      %1743 = vmatprep.subr.mxu0 0.0
      %1744 = vmatpush1.msra.mxu0 0.0
      %1745 = vmatprep.mubr.f32.mxu0 0.0
      %1746 = vmatmul.mubr.f32.gmra.mrb[0].mxu0 %v1663
      %v1747 = vpop.f32.mrb[0].mxu0
      %v1748 = vadd.f32 %v156, %v1747
      %v1749 = vpop.f32.mrb[0].mxu0
      %1750 = vmatprep.mubr.f32.mxu0 0.0
      %1751 = vmatmul.mubr.f32.gmra.mrb[0].mxu0 %v1668
      %v1752 = vpop.f32.mrb[0].mxu0
      %v1753 = vadd.f32 %v161, %v1752
      %v1754 = vpop.f32.mrb[0].mxu0
      %1755 = vmatprep.mubr.f32.mxu0 0.0
      %1756 = vmatmul.mubr.f32.gmra.mrb[0].mxu0 %v1673
      %v1757 = vpop.f32.mrb[0].mxu0
      %v1758 = vadd.f32 %v166, %v1757
      %v1759 = vpop.f32.mrb[0].mxu0
      %1760 = vmatprep.mubr.f32.mxu0 0.0
      %1761 = vmatmul.mubr.f32.gmra.mrb[0].mxu0 %v1678
      %v1762 = vpop.f32.mrb[0].mxu0
      %v1763 = vadd.f32 %v171, %v1762
      %v1764 = vpop.f32.mrb[0].mxu0
      %1765 = vdwg.mxu0
      %v1766 = vmax.f32 %v1748, 0.0
      %v1767 = vmax.f32 %v1753, 0.0
      %v1768 = vmax.f32 %v1758, 0.0
      %v1769 = vmax.f32 %v1763, 0.0
      %1770 = vmatprep.subr.mxu0 0.0
      %1771 = vmatpush1.msra.mxu0 %v1766
      %1772 = vmatprep.subr.mxu0 0.0
      %1773 = vmatpush1.msra.mxu0 %v1767
      %1774 = vmatprep.subr.mxu0 0.0
      %1775 = vmatpush1.msra.mxu0 %v1768
      %1776 = vmatprep.subr.mxu0 0.0
      %1777 = vmatpush1.msra.mxu0 %v1769
      %1778 = vmatprep.subr.mxu0 0.0
      %1779 = vmatpush1.msra.mxu0 0.0
      %1780 = vmatprep.subr.mxu0 0.0
      %1781 = vmatpush1.msra.mxu0 0.0
      %1782 = vmatprep.subr.mxu0 0.0
      %1783 = vmatpush1.msra.mxu0 0.0
      %1784 = vmatprep.subr.mxu0 0.0
      %1785 = vmatpush1.msra.mxu0 0.0
      %1786 = vmatprep.subr.mxu0 0.0
      %1787 = vmatpush1.msra.mxu0 0.0
      %1788 = vmatprep.subr.mxu0 0.0
      %1789 = vmatpush1.msra.mxu0 0.0
      %1790 = vmatprep.subr.mxu0 0.0
      %1791 = vmatpush1.msra.mxu0 0.0
      %1792 = vmatprep.subr.mxu0 0.0
      %1793 = vmatpush1.msra.mxu0 0.0
      %1794 = vmatprep.subr.mxu0 0.0
      %1795 = vmatpush1.msra.mxu0 0.0
      %1796 = vmatprep.subr.mxu0 0.0
      %1797 = vmatpush1.msra.mxu0 0.0
      %1798 = vmatprep.subr.mxu0 0.0
      %1799 = vmatpush1.msra.mxu0 0.0
      %1800 = vmatprep.subr.mxu0 0.0
      %1801 = vmatpush1.msra.mxu0 0.0
      %1802 = vmatprep.subr.mxu0 0.0
      %1803 = vmatpush1.msra.mxu0 0.0
      %1804 = vmatprep.subr.mxu0 0.0
      %1805 = vmatpush1.msra.mxu0 0.0
      %1806 = vmatprep.subr.mxu0 0.0
      %1807 = vmatpush1.msra.mxu0 0.0
      %1808 = vmatprep.subr.mxu0 0.0
      %1809 = vmatpush1.msra.mxu0 0.0
      %1810 = vmatprep.subr.mxu0 0.0
      %1811 = vmatpush1.msra.mxu0 0.0
      %1812 = vmatprep.subr.mxu0 0.0
      %1813 = vmatpush1.msra.mxu0 0.0
      %1814 = vmatprep.subr.mxu0 0.0
      %1815 = vmatpush1.msra.mxu0 0.0
      %1816 = vmatprep.subr.mxu0 0.0
      %1817 = vmatpush1.msra.mxu0 0.0
      %1818 = vmatprep.subr.mxu0 0.0
      %1819 = vmatpush1.msra.mxu0 0.0
      %1820 = vmatprep.subr.mxu0 0.0
      %1821 = vmatpush1.msra.mxu0 0.0
      %1822 = vmatprep.subr.mxu0 0.0
      %1823 = vmatpush1.msra.mxu0 0.0
      %1824 = vmatprep.subr.mxu0 0.0
      %1825 = vmatpush1.msra.mxu0 0.0
      %1826 = vmatprep.subr.mxu0 0.0
      %1827 = vmatpush1.msra.mxu0 0.0
      %1828 = vmatprep.subr.mxu0 0.0
      %1829 = vmatpush1.msra.mxu0 0.0
      %1830 = vmatprep.subr.mxu0 0.0
      %1831 = vmatpush1.msra.mxu0 0.0
      %1832 = vmatprep.subr.mxu0 0.0
      %1833 = vmatpush1.msra.mxu0 0.0
      %1834 = vmatprep.mubr.f32.mxu0 0.0
      %1835 = vmatmul.mubr.f32.gmra.mrb[0].mxu0 %v193
      %v1836 = vpop.f32.mrb[0].mxu0
      %v1837 = vadd.f32 0.0, %v1836
      %v1838 = vpop.f32.mrb[0].mxu0
      %1839 = vmatprep.mubr.f32.mxu0 0.0
      %1840 = vmatmul.mubr.f32.gmra.mrb[0].mxu0 %v196
      %v1841 = vpop.f32.mrb[0].mxu0
      %v1842 = vadd.f32 0.0, %v1841
      %v1843 = vpop.f32.mrb[0].mxu0
      %1844 = vmatprep.mubr.f32.mxu0 0.0
      %1845 = vmatmul.mubr.f32.gmra.mrb[0].mxu0 %v199
      %v1846 = vpop.f32.mrb[0].mxu0
      %v1847 = vadd.f32 0.0, %v1846
      %v1848 = vpop.f32.mrb[0].mxu0
      %1849 = vmatprep.mubr.f32.mxu0 0.0
      %1850 = vmatmul.mubr.f32.gmra.mrb[0].mxu0 %v202
      %v1851 = vpop.f32.mrb[0].mxu0
      %v1852 = vadd.f32 0.0, %v1851
      %v1853 = vpop.f32.mrb[0].mxu0
      %1854 = vdwg.mxu0
      %1855 = vmatprep.subr.mxu0 0.0
      %1856 = vmatpush1.msra.mxu0 %v53
      %1857 = vmatprep.subr.mxu0 0.0
      %1858 = vmatpush1.msra.mxu0 %v54
      %1859 = vmatprep.subr.mxu0 0.0
      %1860 = vmatpush1.msra.mxu0 %v55
      %1861 = vmatprep.subr.mxu0 0.0
      %1862 = vmatpush1.msra.mxu0 %v56
      %1863 = vmatprep.subr.mxu0 0.0
      %1864 = vmatpush1.msra.mxu0 %v57
      %1865 = vmatprep.subr.mxu0 0.0
      %1866 = vmatpush1.msra.mxu0 %v58
      %1867 = vmatprep.subr.mxu0 0.0
      %1868 = vmatpush1.msra.mxu0 %v59
      %1869 = vmatprep.subr.mxu0 0.0
      %1870 = vmatpush1.msra.mxu0 %v60
      %1871 = vmatprep.subr.mxu0 0.0
      %1872 = vmatpush1.msra.mxu0 %v61
      %1873 = vmatprep.subr.mxu0 0.0
      %1874 = vmatpush1.msra.mxu0 %v62
      %1875 = vmatprep.subr.mxu0 0.0
      %1876 = vmatpush1.msra.mxu0 %v63
      %1877 = vmatprep.subr.mxu0 0.0
      %1878 = vmatpush1.msra.mxu0 %v64
      %1879 = vmatprep.subr.mxu0 0.0
      %1880 = vmatpush1.msra.mxu0 %v65
      %1881 = vmatprep.subr.mxu0 0.0
      %1882 = vmatpush1.msra.mxu0 %v66
      %1883 = vmatprep.subr.mxu0 0.0
      %1884 = vmatpush1.msra.mxu0 %v67
      %1885 = vmatprep.subr.mxu0 0.0
      %1886 = vmatpush1.msra.mxu0 %v68
      %1887 = vmatprep.subr.mxu0 0.0
      %1888 = vmatpush1.msra.mxu0 0.0
      %1889 = vmatprep.subr.mxu0 0.0
      %1890 = vmatpush1.msra.mxu0 0.0
      %1891 = vmatprep.subr.mxu0 0.0
      %1892 = vmatpush1.msra.mxu0 0.0
      %1893 = vmatprep.subr.mxu0 0.0
      %1894 = vmatpush1.msra.mxu0 0.0
      %1895 = vmatprep.subr.mxu0 0.0
      %1896 = vmatpush1.msra.mxu0 0.0
      %1897 = vmatprep.subr.mxu0 0.0
      %1898 = vmatpush1.msra.mxu0 0.0
      %1899 = vmatprep.subr.mxu0 0.0
      %1900 = vmatpush1.msra.mxu0 0.0
      %1901 = vmatprep.subr.mxu0 0.0
      %1902 = vmatpush1.msra.mxu0 0.0
      %1903 = vmatprep.subr.mxu0 0.0
      %1904 = vmatpush1.msra.mxu0 0.0
      %1905 = vmatprep.subr.mxu0 0.0
      %1906 = vmatpush1.msra.mxu0 0.0
      %1907 = vmatprep.subr.mxu0 0.0
      %1908 = vmatpush1.msra.mxu0 0.0
      %1909 = vmatprep.subr.mxu0 0.0
      %1910 = vmatpush1.msra.mxu0 0.0
      %1911 = vmatprep.subr.mxu0 0.0
      %1912 = vmatpush1.msra.mxu0 0.0
      %1913 = vmatprep.subr.mxu0 0.0
      %1914 = vmatpush1.msra.mxu0 0.0
      %1915 = vmatprep.subr.mxu0 0.0
      %1916 = vmatpush1.msra.mxu0 0.0
      %1917 = vmatprep.subr.mxu0 0.0
      %1918 = vmatpush1.msra.mxu0 0.0
      %1919 = vmatprep.mubr.f32.mxu0 0.0
      %1920 = vmatmul.mubr.f32.gmra.mrb[0].mxu0 %v1837
      %v1921 = vpop.f32.mrb[0].mxu0
      %v1922 = vadd.f32 %v156, %v1921
      %v1923 = vpop.f32.mrb[0].mxu0
      %1924 = vmatprep.mubr.f32.mxu0 0.0
      %1925 = vmatmul.mubr.f32.gmra.mrb[0].mxu0 %v1842
      %v1926 = vpop.f32.mrb[0].mxu0
      %v1927 = vadd.f32 %v161, %v1926
      %v1928 = vpop.f32.mrb[0].mxu0
      %1929 = vmatprep.mubr.f32.mxu0 0.0
      %1930 = vmatmul.mubr.f32.gmra.mrb[0].mxu0 %v1847
      %v1931 = vpop.f32.mrb[0].mxu0
      %v1932 = vadd.f32 %v166, %v1931
      %v1933 = vpop.f32.mrb[0].mxu0
      %1934 = vmatprep.mubr.f32.mxu0 0.0
      %1935 = vmatmul.mubr.f32.gmra.mrb[0].mxu0 %v1852
      %v1936 = vpop.f32.mrb[0].mxu0
      %v1937 = vadd.f32 %v171, %v1936
      %v1938 = vpop.f32.mrb[0].mxu0
      %1939 = vdwg.mxu0
      %v1940 = vmax.f32 %v1922, 0.0
      %v1941 = vmax.f32 %v1927, 0.0
      %v1942 = vmax.f32 %v1932, 0.0
      %v1943 = vmax.f32 %v1937, 0.0
      %v1944 = vsub.f32 %v1940, %v1766
      %v1945 = vsub.f32 %v1941, %v1767
      %v1946 = vsub.f32 %v1942, %v1768
      %v1947 = vsub.f32 %v1943, %v1769
      %v1948 = vand.u32 2147483647, %v1944
      %v1949 = vand.u32 2147483647, %v1945
      %v1950 = vand.u32 2147483647, %v1946
      %v1951 = vand.u32 2147483647, %v1947
      %v1952 = vmax.f32 %v1948, %v1949
      %v1953 = vmax.f32 %v1950, %v1951
      %v1954 = vmax.f32 %v1952, %v1953
      %1955 = vmax.xlane.f32.xlu0 %v1954
      %v1956 = vpop.xlane.xlu0 %1955
      %v1957 = vrot.slane %v1956, 4
      %v1958 = vmax.f32 %v1956, %v1957
      %v1959 = vrot.slane %v1958, 2
      %v1960 = vmax.f32 %v1958, %v1959
      %v1961 = vrot.slane %v1960, 1
      %v1962 = vmax.f32 %v1960, %v1961
      %s1963 = vtos %v1962
      %s1964 = sadd.s32 %s179, 10
    $region34: #{tpu_custom_call.1} parent=1 // loop_footer
      _
    $region35: #{tpu_custom_call.1} parent=1 // loop_footer_branch
      %178 = sbr.rel target = $region31
    $region36: #{tpu_custom_call.1} parent=1 // loop_exit
      _
    %v1965 = vadd.f32 %v156, %v180
    %v1966 = vadd.f32 %v161, %v181
    %v1967 = vadd.f32 %v166, %v182
    %v1968 = vadd.f32 %v171, %v183
    %1969 = vst [vmem:[#allocation7] sm:$0xff] %v1965
    %1970 = vst [vmem:[#allocation7 + $0x8] sm:$0xff] %v1966
    %1971 = vst [vmem:[#allocation7 + $0x10] sm:$0xff] %v1967
    %1972 = vst [vmem:[#allocation7 + $0x18] sm:$0xff] %v1968
    // Predicated region
    $region37: #{tpu_custom_call.1} parent=1 // pred_check
      _
    $region38: #{tpu_custom_call.1} parent=1 // pred_check_branch
      %1974 = sbr.rel (0) target = $region40
    $region39: #{tpu_custom_call.1} parent=1 // pred_region
      %s1976 = ssub.s32 512, 512
      %1977 = vsyncadd [#allocation4], %s1976
      %s1978 = sshll.u32 [#allocation7], 4
      %s1979 = int_to_ptr.vmem [resolvable:$true] %s1978
      %1984 = dma.vmem_to_hbm [thread:$0]  %s1979, 512, %s5, [#allocation4], 128, 128, 8
    $region40: #{tpu_custom_call.1} parent=1 // pred_fallthru
      _
    // Predicated region
    $region41: #{tpu_custom_call.1} parent=1 // pred_check
      _
    $region42: #{tpu_custom_call.1} parent=1 // pred_check_branch
      %1986 = sbr.rel (0) target = $region44
    $region43: #{tpu_custom_call.1} parent=1 // pred_region
      %1987 = dma.done [#allocation4], 512
    $region44: #{tpu_custom_call.1} parent=1 // pred_fallthru
      _
    %1988 = vsyncpa [#allocation3], 1
    %1989 = vsyncpa [#allocation6], 1
    %1990 = vsyncpa [#allocation4], 1

</llo_original>
